<compile_context>
chip_gen: v5e
topology: v5e:2x2
jax: 0.10.0
libtpu: 0.0.40
codegen_flags: <defaults>
</compile_context>

<pallas_src>
import jax
import jax.numpy as jnp
import numpy as np
from jax import lax
from jax.experimental import pallas as pl
from jax.experimental.pallas import tpu as pltpu


# ---------------------------------------------------------------------------
# Fused kernel
# ---------------------------------------------------------------------------

def _make_fused_kernel(T, B, E, H):
    TB = T * B
    G = 4 * H

    def kernel(xf_ref, cw_ref, cb_ref, gamma_ref, beta_ref,
               wih1_ref, whh1_ref, b1_ref,
               wih2_ref, whh2_ref, b2_ref,
               wlin_ref, blin_ref, len_ref,
               out_ref, xt_ref):
        f32 = jnp.float32

        # ---- Conv1d(E, E, k=3, pad=1): single fused matmul ------------------
        # Flattened time-major layout (row m = t*B + b) -> a time shift of +/-1
        # is a row shift of +/-B.  The three taps are concatenated along the
        # lane axis into one (TB, 3E) scratch so the whole conv is one MXU push
        # against the (3E, E) stacked weight (instead of 3 pushes + 2 adds).
        zbe = jnp.zeros((B, E), f32)
        xt_ref[0:B, 0:E] = zbe                               # tap t-1: zero halo
        xt_ref[B:TB, 0:E] = xf_ref[0:TB - B, :]              # tap t-1
        xt_ref[:, E:2 * E] = xf_ref[...]                     # tap t (center)
        xt_ref[0:TB - B, 2 * E:3 * E] = xf_ref[B:TB, :]      # tap t+1
        xt_ref[TB - B:TB, 2 * E:3 * E] = zbe                 # tap t+1: zero halo
        y = (jnp.dot(xt_ref[...], cw_ref[...], preferred_element_type=f32)
             + cb_ref[...])                                  # (TB, E)

        # ---- BatchNorm1d (training/batch statistics) + ReLU -----------------
        inv_n = 1.0 / float(TB)
        mean = jnp.sum(y, axis=0, keepdims=True) * inv_n
        d = y - mean
        var = jnp.sum(d * d, axis=0, keepdims=True) * inv_n
        act = jnp.maximum(d * lax.rsqrt(var + 1e-5) * gamma_ref[...]
                          + beta_ref[...], 0.0)              # (TB, E)
        # TODO(synk): BatchNorm running-statistics update (training-time side
        # effect of the PyTorch module) is not modeled; only the forward output.

        # ---- layer-1 input projection: one lane-packed matmul, all timesteps -
        # Gates packed (i|f|g|o) along lanes, 4H = 128 = native lane width; the
        # result stays live in vregs (no VMEM scratch round-trip).
        xg1 = (jnp.dot(act, wih1_ref[...], preferred_element_type=f32)
               + b1_ref[...])                                # (TB, 4H)

        # ---- recurrent weights / constants hoisted out of the unrolled loop -
        whh1 = whh1_ref[...]                                 # (H, 4H)
        wih2 = wih2_ref[...]                                 # (H, 4H)
        whh2 = whh2_ref[...]                                 # (H, 4H)
        b2 = b2_ref[...]                                     # (1, 4H)
        lengths = len_ref[...]                               # (B, 1) int32
        lane = lax.broadcasted_iota(jnp.int32, (B, G), 1)
        g_lane = (lane >= 2 * H) & (lane < 3 * H)            # tanh (cell-gate) lanes

        h1 = jnp.zeros((B, H), f32)
        c1 = jnp.zeros((B, H), f32)
        h2 = jnp.zeros((B, H), f32)
        c2 = jnp.zeros((B, H), f32)

        def cell(pre, h, c, valid):
            # pre: (B, 4H) lane-packed gate pre-activations, order (i, f, g, o).
            # One sigmoid + one tanh over the full 128-lane vreg, lane-mask
            # select, then free static lane slices for the four gate blocks.
            gall = jnp.where(g_lane, jnp.tanh(pre), jax.nn.sigmoid(pre))
            gi = gall[:, 0:H]
            gf = gall[:, H:2 * H]
            gg = gall[:, 2 * H:3 * H]
            go = gall[:, 3 * H:4 * H]
            c_new = gf * c + gi * gg
            h_new = go * jnp.tanh(c_new)
            return jnp.where(valid, h_new, h), jnp.where(valid, c_new, c)

        # Fully unrolled 2-layer recurrence (T static & small; ~35 live vregs,
        # well under 64, so no spill pressure).  Packed-sequence semantics:
        # (h, c) freeze once t >= lengths[b], so h2 after the loop is each
        # sequence's final hidden state (== hn[-1] in PyTorch).
        for t in range(T):
            valid = t < lengths                              # (B, 1) bool
            # Explicit accumulation chains (v7x MRB in-place accumulate path).
            pre1 = jnp.dot(h1, whh1, preferred_element_type=f32)
            pre1 = pre1 + xg1[t * B:(t + 1) * B, :]
            h1, c1 = cell(pre1, h1, c1, valid)
            pre2 = jnp.dot(h1, wih2, preferred_element_type=f32)
            pre2 = pre2 + jnp.dot(h2, whh2, preferred_element_type=f32)
            pre2 = pre2 + b2
            h2, c2 = cell(pre2, h2, c2, valid)

        # ---- Linear head (lane-padded to 128 cols -> unmasked full store) ---
        out_ref[...] = (jnp.dot(h2, wlin_ref[...], preferred_element_type=f32)
                        + blin_ref[...])

    return kernel


# ---------------------------------------------------------------------------
# pallas_call plumbing
# ---------------------------------------------------------------------------

def _full_spec(shape):
    nd = len(shape)
    return pl.BlockSpec(shape, lambda i, _nd=nd: (0,) * _nd)


def icassp1_cnn_forward(x, lengths, p):
    """x: (T, B, E) float32 padded sequence; lengths: (B,) int32 (sorted desc)."""
    T, B, E = x.shape
    H = p['whh1'].shape[-1]
    L = p['wlin'].shape[1]
    TB = T * B
    G = 4 * H
    LP = 128                                    # lane-padded label width
    assert L <= LP

    xf = x.reshape(TB, E)                       # free row-major flatten (t-major)
    len2d = lengths.reshape(B, 1).astype(jnp.int32)

    # ---- one-time weight packing (pure layout plumbing) ---------------------
    def pack_gates(w):                          # (4, D, H) -> (D, 4H), i|f|g|o lanes
        return jnp.transpose(w, (1, 0, 2)).reshape(w.shape[1], G)

    cw_stack = p['conv_w'].reshape(3 * E, E)    # stacked taps for the fused conv matmul
    wih1_p = pack_gates(p['wih1'])
    whh1_p = pack_gates(p['whh1'])
    wih2_p = pack_gates(p['wih2'])
    whh2_p = pack_gates(p['whh2'])
    b1_p = jnp.transpose(p['b1'], (1, 0, 2)).reshape(1, G)
    b2_p = jnp.transpose(p['b2'], (1, 0, 2)).reshape(1, G)
    wlin_p = jnp.zeros((H, LP), jnp.float32).at[:, :L].set(p['wlin'])
    blin_p = jnp.zeros((1, LP), jnp.float32).at[:, :L].set(p['blin'])

    args = (xf, cw_stack, p['conv_b'], p['bn_gamma'], p['bn_beta'],
            wih1_p, whh1_p, b1_p, wih2_p, whh2_p, b2_p,
            wlin_p, blin_p, len2d)

    # TODO(synk): for very large batches, add a "parallel" batch-tile grid axis
    # (megacore / v7x dual-TC).  That requires a BatchNorm-stats pre-pass since
    # the batch statistics couple all sequences, so a single invocation is kept
    # here (total VMEM residency < 0.2 MiB on every generation).
    kernel = _make_fused_kernel(T, B, E, H)
    out = pl.pallas_call(
        kernel,
        out_shape=jax.ShapeDtypeStruct((B, LP), jnp.float32),
        grid_spec=pltpu.PrefetchScalarGridSpec(
            num_scalar_prefetch=0,
            grid=(1,),
            in_specs=[_full_spec(a.shape) for a in args],
            out_specs=_full_spec((B, LP)),
            scratch_shapes=[
                pltpu.VMEM((TB, 3 * E), jnp.float32),   # tap-concatenated conv input
            ],
        ),
        compiler_params=pltpu.CompilerParams(
            dimension_semantics=("arbitrary",)),
    )(*args)
    return out[:, :L]


# ---------------------------------------------------------------------------
# Pure-JAX reference (same math) for validation
# ---------------------------------------------------------------------------

def reference_forward(x, lengths, p):
    T, B, E = x.shape
    H = p['whh1'].shape[-1]
    xpad = jnp.pad(x, ((1, 1), (0, 0), (0, 0)))
    y = (jnp.einsum('tbe,eo->tbo', xpad[0:T], p['conv_w'][0])
         + jnp.einsum('tbe,eo->tbo', xpad[1:T + 1], p['conv_w'][1])
         + jnp.einsum('tbe,eo->tbo', xpad[2:T + 2], p['conv_w'][2])
         + p['conv_b'])
    mean = y.mean(axis=(0, 1), keepdims=True)
    var = ((y - mean) ** 2).mean(axis=(0, 1), keepdims=True)
    act = jnp.maximum((y - mean) * lax.rsqrt(var + 1e-5) * p['bn_gamma']
                      + p['bn_beta'], 0.0)

    mask = (jnp.arange(T)[:, None] < lengths[None, :])[..., None]     # (T, B, 1)

    def layer(xseq, wih, whh, b):
        def step(carry, inp):
            h, c = carry
            x_t, m = inp
            g = [x_t @ wih[k] + h @ whh[k] + b[k] for k in range(4)]
            i = jax.nn.sigmoid(g[0])
            f = jax.nn.sigmoid(g[1])
            gc = jnp.tanh(g[2])
            o = jax.nn.sigmoid(g[3])
            c_new = f * c + i * gc
            h_new = o * jnp.tanh(c_new)
            h = jnp.where(m, h_new, h)
            c = jnp.where(m, c_new, c)
            return (h, c), h

        init = (jnp.zeros((B, H), jnp.float32), jnp.zeros((B, H), jnp.float32))
        (hT, _), hseq = lax.scan(step, init, (xseq, mask))
        return hseq, hT

    hseq0, _ = layer(act, p['wih1'], p['whh1'], p['b1'])
    _, hfin = layer(hseq0, p['wih2'], p['whh2'], p['b2'])
    return hfin @ p['wlin'] + p['blin']


# ---------------------------------------------------------------------------
# Main
# ---------------------------------------------------------------------------

if __name__ == "__main__":
    # Small shapes consistent with the module (embed_size=E, hidden=H, labels=L).
    # B=8 fills all 8 sublanes of every recurrent vreg (perf review item 5).
    T, B, E, H, L = 8, 8, 32, 32, 31
    s = 0.1
    ks = jax.random.split(jax.random.PRNGKey(0), 13)
    p = {
        'conv_w':   jax.random.normal(ks[0], (3, E, E), jnp.float32) * s,   # w[k, c_in, c_out]
        'conv_b':   jax.random.normal(ks[1], (1, E), jnp.float32) * s,
        'bn_gamma': 1.0 + jax.random.normal(ks[2], (1, E), jnp.float32) * s,
        'bn_beta':  jax.random.normal(ks[3], (1, E), jnp.float32) * s,
        # Per-gate LSTM weights, gate order (i, f, g, o); biases = b_ih + b_hh.
        'wih1':     jax.random.normal(ks[4], (4, E, H), jnp.float32) * s,
        'whh1':     jax.random.normal(ks[5], (4, H, H), jnp.float32) * s,
        'b1':       jax.random.normal(ks[6], (4, 1, H), jnp.float32) * s,
        'wih2':     jax.random.normal(ks[7], (4, H, H), jnp.float32) * s,
        'whh2':     jax.random.normal(ks[8], (4, H, H), jnp.float32) * s,
        'b2':       jax.random.normal(ks[9], (4, 1, H), jnp.float32) * s,
        'wlin':     jax.random.normal(ks[10], (H, L), jnp.float32) * s,
        'blin':     jax.random.normal(ks[11], (1, L), jnp.float32) * s,
    }
    x = jax.random.normal(ks[12], (T, B, E), jnp.float32)
    # pack_padded_sequence default enforce_sorted=True -> lengths sorted descending.
    lengths = jnp.array([8, 8, 7, 6, 5, 4, 3, 2], dtype=jnp.int32)

    fwd = jax.jit(icassp1_cnn_forward)
    logits = jax.block_until_ready(fwd(x, lengths, p))
    ref = jax.block_until_ready(reference_forward(x, lengths, p))
    np.testing.assert_allclose(np.asarray(logits), np.asarray(ref),
                               rtol=1e-4, atol=1e-4)
    assert logits.shape == (B, L)
    print("KERNEL_OK")
</pallas_src>

<mosaic_0001>
module attributes {stable_mosaic.version = 11 : i64} {
  func.func @kernel(%arg0: i32, %arg1: memref<64x32xf32, #tpu.memory_space<vmem>>, %arg2: memref<96x32xf32, #tpu.memory_space<vmem>>, %arg3: memref<1x32xf32, #tpu.memory_space<vmem>>, %arg4: memref<1x32xf32, #tpu.memory_space<vmem>>, %arg5: memref<1x32xf32, #tpu.memory_space<vmem>>, %arg6: memref<32x128xf32, #tpu.memory_space<vmem>>, %arg7: memref<32x128xf32, #tpu.memory_space<vmem>>, %arg8: memref<1x128xf32, #tpu.memory_space<vmem>>, %arg9: memref<32x128xf32, #tpu.memory_space<vmem>>, %arg10: memref<32x128xf32, #tpu.memory_space<vmem>>, %arg11: memref<1x128xf32, #tpu.memory_space<vmem>>, %arg12: memref<32x128xf32, #tpu.memory_space<vmem>>, %arg13: memref<1x128xf32, #tpu.memory_space<vmem>>, %arg14: memref<8x1xi32, #tpu.memory_space<vmem>>, %arg15: memref<8x128xf32, #tpu.memory_space<vmem>>, %arg16: memref<64x96xf32, #tpu.memory_space<vmem>>) attributes {dimension_semantics = [#tpu.dimension_semantics<arbitrary>], iteration_bounds = array<i64: 1>, scalar_prefetch = 0 : i64, scratch_operands = 1 : i64, tpu.core_type = #tpu.core_type<tc>, window_params = [{pipeline_mode = #tpu.pipeline_mode<synchronous>, transform_indices = @transform_0, window_bounds = array<i64: 64, 32>}, {pipeline_mode = #tpu.pipeline_mode<synchronous>, transform_indices = @transform_1, window_bounds = array<i64: 96, 32>}, {pipeline_mode = #tpu.pipeline_mode<synchronous>, transform_indices = @transform_2, window_bounds = array<i64: 1, 32>}, {pipeline_mode = #tpu.pipeline_mode<synchronous>, transform_indices = @transform_3, window_bounds = array<i64: 1, 32>}, {pipeline_mode = #tpu.pipeline_mode<synchronous>, transform_indices = @transform_4, window_bounds = array<i64: 1, 32>}, {pipeline_mode = #tpu.pipeline_mode<synchronous>, transform_indices = @transform_5, window_bounds = array<i64: 32, 128>}, {pipeline_mode = #tpu.pipeline_mode<synchronous>, transform_indices = @transform_6, window_bounds = array<i64: 32, 128>}, {pipeline_mode = #tpu.pipeline_mode<synchronous>, transform_indices = @transform_7, window_bounds = array<i64: 1, 128>}, {pipeline_mode = #tpu.pipeline_mode<synchronous>, transform_indices = @transform_8, window_bounds = array<i64: 32, 128>}, {pipeline_mode = #tpu.pipeline_mode<synchronous>, transform_indices = @transform_9, window_bounds = array<i64: 32, 128>}, {pipeline_mode = #tpu.pipeline_mode<synchronous>, transform_indices = @transform_10, window_bounds = array<i64: 1, 128>}, {pipeline_mode = #tpu.pipeline_mode<synchronous>, transform_indices = @transform_11, window_bounds = array<i64: 32, 128>}, {pipeline_mode = #tpu.pipeline_mode<synchronous>, transform_indices = @transform_12, window_bounds = array<i64: 1, 128>}, {pipeline_mode = #tpu.pipeline_mode<synchronous>, transform_indices = @transform_13, window_bounds = array<i64: 8, 1>}, {pipeline_mode = #tpu.pipeline_mode<synchronous>, transform_indices = @transform_14, window_bounds = array<i64: 8, 128>}]} {
    %cst = arith.constant 0.000000e+00 : f32
    %0 = vector.broadcast %cst : f32 to vector<8x32xf32>
    %c0 = arith.constant 0 : index
    %c0_0 = arith.constant 0 : index
    %1 = vector.load %arg16[%c0, %c0_0] : memref<64x96xf32, #tpu.memory_space<vmem>>, vector<8x32xf32>
    tpu.vector_store %arg16[%c0, %c0_0], %0 {strides = array<i32>} : memref<64x96xf32, #tpu.memory_space<vmem>>, vector<8x32xf32>,
    %c0_1 = arith.constant 0 : index
    %c0_2 = arith.constant 0 : index
    %2 = vector.load %arg1[%c0_1, %c0_2] : memref<64x32xf32, #tpu.memory_space<vmem>>, vector<56x32xf32>
    %c8 = arith.constant 8 : index
    %c0_3 = arith.constant 0 : index
    %3 = vector.load %arg16[%c8, %c0_3] : memref<64x96xf32, #tpu.memory_space<vmem>>, vector<56x32xf32>
    tpu.vector_store %arg16[%c8, %c0_3], %2 {strides = array<i32>} : memref<64x96xf32, #tpu.memory_space<vmem>>, vector<56x32xf32>,
    %c0_4 = arith.constant 0 : index
    %c0_5 = arith.constant 0 : index
    %4 = vector.load %arg1[%c0_4, %c0_5] : memref<64x32xf32, #tpu.memory_space<vmem>>, vector<64x32xf32>
    %c0_6 = arith.constant 0 : index
    %c32 = arith.constant 32 : index
    %5 = vector.load %arg16[%c0_6, %c32] : memref<64x96xf32, #tpu.memory_space<vmem>>, vector<64x32xf32>
    tpu.vector_store %arg16[%c0_6, %c32], %4 {strides = array<i32>} : memref<64x96xf32, #tpu.memory_space<vmem>>, vector<64x32xf32>,
    %c8_7 = arith.constant 8 : index
    %c0_8 = arith.constant 0 : index
    %6 = vector.load %arg1[%c8_7, %c0_8] : memref<64x32xf32, #tpu.memory_space<vmem>>, vector<56x32xf32>
    %c0_9 = arith.constant 0 : index
    %c64 = arith.constant 64 : index
    %7 = vector.load %arg16[%c0_9, %c64] : memref<64x96xf32, #tpu.memory_space<vmem>>, vector<56x32xf32>
    tpu.vector_store %arg16[%c0_9, %c64], %6 {strides = array<i32>} : memref<64x96xf32, #tpu.memory_space<vmem>>, vector<56x32xf32>,
    %c56 = arith.constant 56 : index
    %c64_10 = arith.constant 64 : index
    %8 = vector.load %arg16[%c56, %c64_10] : memref<64x96xf32, #tpu.memory_space<vmem>>, vector<8x32xf32>
    tpu.vector_store %arg16[%c56, %c64_10], %0 {strides = array<i32>} : memref<64x96xf32, #tpu.memory_space<vmem>>, vector<8x32xf32>,
    %c0_11 = arith.constant 0 : index
    %c0_12 = arith.constant 0 : index
    %9 = vector.load %arg16[%c0_11, %c0_12] : memref<64x96xf32, #tpu.memory_space<vmem>>, vector<64x96xf32>
    %c0_13 = arith.constant 0 : index
    %c0_14 = arith.constant 0 : index
    %10 = vector.load %arg2[%c0_13, %c0_14] : memref<96x32xf32, #tpu.memory_space<vmem>>, vector<96x32xf32>
    %cst_15 = arith.constant dense<0.000000e+00> : vector<64x32xf32>
    %11 = tpu.matmul %9, %10, %cst_15 {dimension_numbers = #tpu.dot_dimension_numbers<[1], [0], [0], [1], [0, 0, 1, 1], [], []>} : vector<64x96xf32>, vector<96x32xf32>, vector<64x32xf32> -> vector<64x32xf32>
    %c0_16 = arith.constant 0 : index
    %c0_17 = arith.constant 0 : index
    %12 = vector.load %arg3[%c0_16, %c0_17] : memref<1x32xf32, #tpu.memory_space<vmem>>, vector<1x32xf32>
    %13 = vector.broadcast %12 : vector<1x32xf32> to vector<64x32xf32>
    %14 = arith.addf %11, %13 : vector<64x32xf32>
    %cst_18 = arith.constant dense<0.000000e+00> : vector<32xf32>
    %15 = vector.multi_reduction <add>, %14, %cst_18 [0] : vector<64x32xf32> to vector<32xf32>
    %16 = vector.shape_cast %15 : vector<32xf32> to vector<1x32xf32>
    %cst_19 = arith.constant 1.562500e-02 : f32
    %17 = vector.broadcast %cst_19 : f32 to vector<1x32xf32>
    %18 = arith.mulf %16, %17 : vector<1x32xf32>
    %19 = vector.broadcast %18 : vector<1x32xf32> to vector<64x32xf32>
    %20 = arith.subf %14, %19 : vector<64x32xf32>
    %21 = arith.mulf %20, %20 : vector<64x32xf32>
    %cst_20 = arith.constant dense<0.000000e+00> : vector<32xf32>
    %22 = vector.multi_reduction <add>, %21, %cst_20 [0] : vector<64x32xf32> to vector<32xf32>
    %23 = vector.shape_cast %22 : vector<32xf32> to vector<1x32xf32>
    %cst_21 = arith.constant 1.562500e-02 : f32
    %24 = vector.broadcast %cst_21 : f32 to vector<1x32xf32>
    %25 = arith.mulf %23, %24 : vector<1x32xf32>
    %cst_22 = arith.constant 9.99999974E-6 : f32
    %26 = vector.broadcast %cst_22 : f32 to vector<1x32xf32>
    %27 = arith.addf %25, %26 : vector<1x32xf32>
    %28 = math.rsqrt %27 : vector<1x32xf32>
    %29 = vector.broadcast %28 : vector<1x32xf32> to vector<64x32xf32>
    %30 = arith.mulf %20, %29 : vector<64x32xf32>
    %c0_23 = arith.constant 0 : index
    %c0_24 = arith.constant 0 : index
    %31 = vector.load %arg4[%c0_23, %c0_24] : memref<1x32xf32, #tpu.memory_space<vmem>>, vector<1x32xf32>
    %32 = vector.broadcast %31 : vector<1x32xf32> to vector<64x32xf32>
    %33 = arith.mulf %30, %32 : vector<64x32xf32>
    %c0_25 = arith.constant 0 : index
    %c0_26 = arith.constant 0 : index
    %34 = vector.load %arg5[%c0_25, %c0_26] : memref<1x32xf32, #tpu.memory_space<vmem>>, vector<1x32xf32>
    %35 = vector.broadcast %34 : vector<1x32xf32> to vector<64x32xf32>
    %36 = arith.addf %33, %35 : vector<64x32xf32>
    %cst_27 = arith.constant 0.000000e+00 : f32
    %37 = vector.broadcast %cst_27 : f32 to vector<64x32xf32>
    %38 = arith.maximumf %36, %37 : vector<64x32xf32>
    %c0_28 = arith.constant 0 : index
    %c0_29 = arith.constant 0 : index
    %39 = vector.load %arg6[%c0_28, %c0_29] : memref<32x128xf32, #tpu.memory_space<vmem>>, vector<32x128xf32>
    %cst_30 = arith.constant dense<0.000000e+00> : vector<64x128xf32>
    %40 = tpu.matmul %38, %39, %cst_30 {dimension_numbers = #tpu.dot_dimension_numbers<[1], [0], [0], [1], [0, 0, 1, 1], [], []>} : vector<64x32xf32>, vector<32x128xf32>, vector<64x128xf32> -> vector<64x128xf32>
    %c0_31 = arith.constant 0 : index
    %c0_32 = arith.constant 0 : index
    %41 = vector.load %arg8[%c0_31, %c0_32] : memref<1x128xf32, #tpu.memory_space<vmem>>, vector<1x128xf32>
    %42 = vector.broadcast %41 : vector<1x128xf32> to vector<64x128xf32>
    %43 = arith.addf %40, %42 : vector<64x128xf32>
    %c0_33 = arith.constant 0 : index
    %c0_34 = arith.constant 0 : index
    %44 = vector.load %arg7[%c0_33, %c0_34] : memref<32x128xf32, #tpu.memory_space<vmem>>, vector<32x128xf32>
    %c0_35 = arith.constant 0 : index
    %c0_36 = arith.constant 0 : index
    %45 = vector.load %arg9[%c0_35, %c0_36] : memref<32x128xf32, #tpu.memory_space<vmem>>, vector<32x128xf32>
    %c0_37 = arith.constant 0 : index
    %c0_38 = arith.constant 0 : index
    %46 = vector.load %arg10[%c0_37, %c0_38] : memref<32x128xf32, #tpu.memory_space<vmem>>, vector<32x128xf32>
    %c0_39 = arith.constant 0 : index
    %c0_40 = arith.constant 0 : index
    %47 = vector.load %arg11[%c0_39, %c0_40] : memref<1x128xf32, #tpu.memory_space<vmem>>, vector<1x128xf32>
    %c0_41 = arith.constant 0 : index
    %c0_42 = arith.constant 0 : index
    %48 = vector.load %arg14[%c0_41, %c0_42] : memref<8x1xi32, #tpu.memory_space<vmem>>, vector<8x1xi32>
    %49 = tpu.iota {dimensions = array<i32: 1>} : vector<8x128xi32>
    %c64_i32 = arith.constant 64 : i32
    %50 = vector.broadcast %c64_i32 : i32 to vector<8x128xi32>
    %51 = arith.cmpi sge, %49, %50 : vector<8x128xi32>
    %c96_i32 = arith.constant 96 : i32
    %52 = vector.broadcast %c96_i32 : i32 to vector<8x128xi32>
    %53 = arith.cmpi slt, %49, %52 : vector<8x128xi32>
    %54 = arith.andi %51, %53 : vector<8x128xi1>
    %cst_43 = arith.constant 0.000000e+00 : f32
    %55 = vector.broadcast %cst_43 : f32 to vector<8x32xf32>
    %cst_44 = arith.constant 0.000000e+00 : f32
    %56 = vector.broadcast %cst_44 : f32 to vector<8x32xf32>
    %cst_45 = arith.constant 0.000000e+00 : f32
    %57 = vector.broadcast %cst_45 : f32 to vector<8x32xf32>
    %cst_46 = arith.constant 0.000000e+00 : f32
    %58 = vector.broadcast %cst_46 : f32 to vector<8x32xf32>
    %c0_i32 = arith.constant 0 : i32
    %59 = vector.broadcast %c0_i32 : i32 to vector<8x1xi32>
    %60 = arith.cmpi sgt, %48, %59 : vector<8x1xi32>
    %cst_47 = arith.constant dense<0.000000e+00> : vector<8x128xf32>
    %61 = tpu.matmul %55, %44, %cst_47 {dimension_numbers = #tpu.dot_dimension_numbers<[1], [0], [0], [1], [0, 0, 1, 1], [], []>} : vector<8x32xf32>, vector<32x128xf32>, vector<8x128xf32> -> vector<8x128xf32>
    %62 = vector.extract_strided_slice %43 {offsets = [0, 0], sizes = [8, 128], strides = [1, 1]} : vector<64x128xf32> to vector<8x128xf32>
    %63 = arith.addf %61, %62 : vector<8x128xf32>
    %64 = math.tanh %63 : vector<8x128xf32>
    %65 = arith.negf %63 : vector<8x128xf32>
    %66 = math.exp %65 : vector<8x128xf32>
    %cst_48 = arith.constant 1.000000e+00 : f32
    %67 = vector.broadcast %cst_48 : f32 to vector<8x128xf32>
    %68 = arith.addf %67, %66 : vector<8x128xf32>
    %69 = arith.divf %67, %68 : vector<8x128xf32>
    %70 = arith.select %54, %64, %69 : vector<8x128xi1>, vector<8x128xf32>
    %71 = vector.extract_strided_slice %70 {offsets = [0, 0], sizes = [8, 32], strides = [1, 1]} : vector<8x128xf32> to vector<8x32xf32>
    %72 = vector.extract_strided_slice %70 {offsets = [0, 32], sizes = [8, 32], strides = [1, 1]} : vector<8x128xf32> to vector<8x32xf32>
    %73 = vector.extract_strided_slice %70 {offsets = [0, 64], sizes = [8, 32], strides = [1, 1]} : vector<8x128xf32> to vector<8x32xf32>
    %74 = vector.extract_strided_slice %70 {offsets = [0, 96], sizes = [8, 32], strides = [1, 1]} : vector<8x128xf32> to vector<8x32xf32>
    %75 = arith.mulf %72, %56 : vector<8x32xf32>
    %76 = arith.mulf %71, %73 : vector<8x32xf32>
    %77 = arith.addf %75, %76 : vector<8x32xf32>
    %78 = math.tanh %77 : vector<8x32xf32>
    %79 = arith.mulf %74, %78 : vector<8x32xf32>
    %80 = vector.shape_cast %60 : vector<8x1xi1> to vector<8x1xi1>
    %81 = vector.broadcast %80 : vector<8x1xi1> to vector<8x32xi1>
    %82 = arith.select %81, %79, %55 : vector<8x32xi1>, vector<8x32xf32>
    %83 = vector.shape_cast %60 : vector<8x1xi1> to vector<8x1xi1>
    %84 = vector.broadcast %83 : vector<8x1xi1> to vector<8x32xi1>
    %85 = arith.select %84, %77, %56 : vector<8x32xi1>, vector<8x32xf32>
    %cst_49 = arith.constant dense<0.000000e+00> : vector<8x128xf32>
    %86 = tpu.matmul %82, %45, %cst_49 {dimension_numbers = #tpu.dot_dimension_numbers<[1], [0], [0], [1], [0, 0, 1, 1], [], []>} : vector<8x32xf32>, vector<32x128xf32>, vector<8x128xf32> -> vector<8x128xf32>
    %cst_50 = arith.constant dense<0.000000e+00> : vector<8x128xf32>
    %87 = tpu.matmul %57, %46, %cst_50 {dimension_numbers = #tpu.dot_dimension_numbers<[1], [0], [0], [1], [0, 0, 1, 1], [], []>} : vector<8x32xf32>, vector<32x128xf32>, vector<8x128xf32> -> vector<8x128xf32>
    %88 = arith.addf %86, %87 : vector<8x128xf32>
    %89 = vector.broadcast %47 : vector<1x128xf32> to vector<8x128xf32>
    %90 = arith.addf %88, %89 : vector<8x128xf32>
    %91 = math.tanh %90 : vector<8x128xf32>
    %92 = arith.negf %90 : vector<8x128xf32>
    %93 = math.exp %92 : vector<8x128xf32>
    %cst_51 = arith.constant 1.000000e+00 : f32
    %94 = vector.broadcast %cst_51 : f32 to vector<8x128xf32>
    %95 = arith.addf %94, %93 : vector<8x128xf32>
    %96 = arith.divf %94, %95 : vector<8x128xf32>
    %97 = arith.select %54, %91, %96 : vector<8x128xi1>, vector<8x128xf32>
    %98 = vector.extract_strided_slice %97 {offsets = [0, 0], sizes = [8, 32], strides = [1, 1]} : vector<8x128xf32> to vector<8x32xf32>
    %99 = vector.extract_strided_slice %97 {offsets = [0, 32], sizes = [8, 32], strides = [1, 1]} : vector<8x128xf32> to vector<8x32xf32>
    %100 = vector.extract_strided_slice %97 {offsets = [0, 64], sizes = [8, 32], strides = [1, 1]} : vector<8x128xf32> to vector<8x32xf32>
    %101 = vector.extract_strided_slice %97 {offsets = [0, 96], sizes = [8, 32], strides = [1, 1]} : vector<8x128xf32> to vector<8x32xf32>
    %102 = arith.mulf %99, %58 : vector<8x32xf32>
    %103 = arith.mulf %98, %100 : vector<8x32xf32>
    %104 = arith.addf %102, %103 : vector<8x32xf32>
    %105 = math.tanh %104 : vector<8x32xf32>
    %106 = arith.mulf %101, %105 : vector<8x32xf32>
    %107 = vector.shape_cast %60 : vector<8x1xi1> to vector<8x1xi1>
    %108 = vector.broadcast %107 : vector<8x1xi1> to vector<8x32xi1>
    %109 = arith.select %108, %106, %57 : vector<8x32xi1>, vector<8x32xf32>
    %110 = vector.shape_cast %60 : vector<8x1xi1> to vector<8x1xi1>
    %111 = vector.broadcast %110 : vector<8x1xi1> to vector<8x32xi1>
    %112 = arith.select %111, %104, %58 : vector<8x32xi1>, vector<8x32xf32>
    %c1_i32 = arith.constant 1 : i32
    %113 = vector.broadcast %c1_i32 : i32 to vector<8x1xi32>
    %114 = arith.cmpi sgt, %48, %113 : vector<8x1xi32>
    %cst_52 = arith.constant dense<0.000000e+00> : vector<8x128xf32>
    %115 = tpu.matmul %82, %44, %cst_52 {dimension_numbers = #tpu.dot_dimension_numbers<[1], [0], [0], [1], [0, 0, 1, 1], [], []>} : vector<8x32xf32>, vector<32x128xf32>, vector<8x128xf32> -> vector<8x128xf32>
    %116 = vector.extract_strided_slice %43 {offsets = [8, 0], sizes = [8, 128], strides = [1, 1]} : vector<64x128xf32> to vector<8x128xf32>
    %117 = arith.addf %115, %116 : vector<8x128xf32>
    %118 = math.tanh %117 : vector<8x128xf32>
    %119 = arith.negf %117 : vector<8x128xf32>
    %120 = math.exp %119 : vector<8x128xf32>
    %cst_53 = arith.constant 1.000000e+00 : f32
    %121 = vector.broadcast %cst_53 : f32 to vector<8x128xf32>
    %122 = arith.addf %121, %120 : vector<8x128xf32>
    %123 = arith.divf %121, %122 : vector<8x128xf32>
    %124 = arith.select %54, %118, %123 : vector<8x128xi1>, vector<8x128xf32>
    %125 = vector.extract_strided_slice %124 {offsets = [0, 0], sizes = [8, 32], strides = [1, 1]} : vector<8x128xf32> to vector<8x32xf32>
    %126 = vector.extract_strided_slice %124 {offsets = [0, 32], sizes = [8, 32], strides = [1, 1]} : vector<8x128xf32> to vector<8x32xf32>
    %127 = vector.extract_strided_slice %124 {offsets = [0, 64], sizes = [8, 32], strides = [1, 1]} : vector<8x128xf32> to vector<8x32xf32>
    %128 = vector.extract_strided_slice %124 {offsets = [0, 96], sizes = [8, 32], strides = [1, 1]} : vector<8x128xf32> to vector<8x32xf32>
    %129 = arith.mulf %126, %85 : vector<8x32xf32>
    %130 = arith.mulf %125, %127 : vector<8x32xf32>
    %131 = arith.addf %129, %130 : vector<8x32xf32>
    %132 = math.tanh %131 : vector<8x32xf32>
    %133 = arith.mulf %128, %132 : vector<8x32xf32>
    %134 = vector.shape_cast %114 : vector<8x1xi1> to vector<8x1xi1>
    %135 = vector.broadcast %134 : vector<8x1xi1> to vector<8x32xi1>
    %136 = arith.select %135, %133, %82 : vector<8x32xi1>, vector<8x32xf32>
    %137 = vector.shape_cast %114 : vector<8x1xi1> to vector<8x1xi1>
    %138 = vector.broadcast %137 : vector<8x1xi1> to vector<8x32xi1>
    %139 = arith.select %138, %131, %85 : vector<8x32xi1>, vector<8x32xf32>
    %cst_54 = arith.constant dense<0.000000e+00> : vector<8x128xf32>
    %140 = tpu.matmul %136, %45, %cst_54 {dimension_numbers = #tpu.dot_dimension_numbers<[1], [0], [0], [1], [0, 0, 1, 1], [], []>} : vector<8x32xf32>, vector<32x128xf32>, vector<8x128xf32> -> vector<8x128xf32>
    %cst_55 = arith.constant dense<0.000000e+00> : vector<8x128xf32>
    %141 = tpu.matmul %109, %46, %cst_55 {dimension_numbers = #tpu.dot_dimension_numbers<[1], [0], [0], [1], [0, 0, 1, 1], [], []>} : vector<8x32xf32>, vector<32x128xf32>, vector<8x128xf32> -> vector<8x128xf32>
    %142 = arith.addf %140, %141 : vector<8x128xf32>
    %143 = vector.broadcast %47 : vector<1x128xf32> to vector<8x128xf32>
    %144 = arith.addf %142, %143 : vector<8x128xf32>
    %145 = math.tanh %144 : vector<8x128xf32>
    %146 = arith.negf %144 : vector<8x128xf32>
    %147 = math.exp %146 : vector<8x128xf32>
    %cst_56 = arith.constant 1.000000e+00 : f32
    %148 = vector.broadcast %cst_56 : f32 to vector<8x128xf32>
    %149 = arith.addf %148, %147 : vector<8x128xf32>
    %150 = arith.divf %148, %149 : vector<8x128xf32>
    %151 = arith.select %54, %145, %150 : vector<8x128xi1>, vector<8x128xf32>
    %152 = vector.extract_strided_slice %151 {offsets = [0, 0], sizes = [8, 32], strides = [1, 1]} : vector<8x128xf32> to vector<8x32xf32>
    %153 = vector.extract_strided_slice %151 {offsets = [0, 32], sizes = [8, 32], strides = [1, 1]} : vector<8x128xf32> to vector<8x32xf32>
    %154 = vector.extract_strided_slice %151 {offsets = [0, 64], sizes = [8, 32], strides = [1, 1]} : vector<8x128xf32> to vector<8x32xf32>
    %155 = vector.extract_strided_slice %151 {offsets = [0, 96], sizes = [8, 32], strides = [1, 1]} : vector<8x128xf32> to vector<8x32xf32>
    %156 = arith.mulf %153, %112 : vector<8x32xf32>
    %157 = arith.mulf %152, %154 : vector<8x32xf32>
    %158 = arith.addf %156, %157 : vector<8x32xf32>
    %159 = math.tanh %158 : vector<8x32xf32>
    %160 = arith.mulf %155, %159 : vector<8x32xf32>
    %161 = vector.shape_cast %114 : vector<8x1xi1> to vector<8x1xi1>
    %162 = vector.broadcast %161 : vector<8x1xi1> to vector<8x32xi1>
    %163 = arith.select %162, %160, %109 : vector<8x32xi1>, vector<8x32xf32>
    %164 = vector.shape_cast %114 : vector<8x1xi1> to vector<8x1xi1>
    %165 = vector.broadcast %164 : vector<8x1xi1> to vector<8x32xi1>
    %166 = arith.select %165, %158, %112 : vector<8x32xi1>, vector<8x32xf32>
    %c2_i32 = arith.constant 2 : i32
    %167 = vector.broadcast %c2_i32 : i32 to vector<8x1xi32>
    %168 = arith.cmpi sgt, %48, %167 : vector<8x1xi32>
    %cst_57 = arith.constant dense<0.000000e+00> : vector<8x128xf32>
    %169 = tpu.matmul %136, %44, %cst_57 {dimension_numbers = #tpu.dot_dimension_numbers<[1], [0], [0], [1], [0, 0, 1, 1], [], []>} : vector<8x32xf32>, vector<32x128xf32>, vector<8x128xf32> -> vector<8x128xf32>
    %170 = vector.extract_strided_slice %43 {offsets = [16, 0], sizes = [8, 128], strides = [1, 1]} : vector<64x128xf32> to vector<8x128xf32>
    %171 = arith.addf %169, %170 : vector<8x128xf32>
    %172 = math.tanh %171 : vector<8x128xf32>
    %173 = arith.negf %171 : vector<8x128xf32>
    %174 = math.exp %173 : vector<8x128xf32>
    %cst_58 = arith.constant 1.000000e+00 : f32
    %175 = vector.broadcast %cst_58 : f32 to vector<8x128xf32>
    %176 = arith.addf %175, %174 : vector<8x128xf32>
    %177 = arith.divf %175, %176 : vector<8x128xf32>
    %178 = arith.select %54, %172, %177 : vector<8x128xi1>, vector<8x128xf32>
    %179 = vector.extract_strided_slice %178 {offsets = [0, 0], sizes = [8, 32], strides = [1, 1]} : vector<8x128xf32> to vector<8x32xf32>
    %180 = vector.extract_strided_slice %178 {offsets = [0, 32], sizes = [8, 32], strides = [1, 1]} : vector<8x128xf32> to vector<8x32xf32>
    %181 = vector.extract_strided_slice %178 {offsets = [0, 64], sizes = [8, 32], strides = [1, 1]} : vector<8x128xf32> to vector<8x32xf32>
    %182 = vector.extract_strided_slice %178 {offsets = [0, 96], sizes = [8, 32], strides = [1, 1]} : vector<8x128xf32> to vector<8x32xf32>
    %183 = arith.mulf %180, %139 : vector<8x32xf32>
    %184 = arith.mulf %179, %181 : vector<8x32xf32>
    %185 = arith.addf %183, %184 : vector<8x32xf32>
    %186 = math.tanh %185 : vector<8x32xf32>
    %187 = arith.mulf %182, %186 : vector<8x32xf32>
    %188 = vector.shape_cast %168 : vector<8x1xi1> to vector<8x1xi1>
    %189 = vector.broadcast %188 : vector<8x1xi1> to vector<8x32xi1>
    %190 = arith.select %189, %187, %136 : vector<8x32xi1>, vector<8x32xf32>
    %191 = vector.shape_cast %168 : vector<8x1xi1> to vector<8x1xi1>
    %192 = vector.broadcast %191 : vector<8x1xi1> to vector<8x32xi1>
    %193 = arith.select %192, %185, %139 : vector<8x32xi1>, vector<8x32xf32>
    %cst_59 = arith.constant dense<0.000000e+00> : vector<8x128xf32>
    %194 = tpu.matmul %190, %45, %cst_59 {dimension_numbers = #tpu.dot_dimension_numbers<[1], [0], [0], [1], [0, 0, 1, 1], [], []>} : vector<8x32xf32>, vector<32x128xf32>, vector<8x128xf32> -> vector<8x128xf32>
    %cst_60 = arith.constant dense<0.000000e+00> : vector<8x128xf32>
    %195 = tpu.matmul %163, %46, %cst_60 {dimension_numbers = #tpu.dot_dimension_numbers<[1], [0], [0], [1], [0, 0, 1, 1], [], []>} : vector<8x32xf32>, vector<32x128xf32>, vector<8x128xf32> -> vector<8x128xf32>
    %196 = arith.addf %194, %195 : vector<8x128xf32>
    %197 = vector.broadcast %47 : vector<1x128xf32> to vector<8x128xf32>
    %198 = arith.addf %196, %197 : vector<8x128xf32>
    %199 = math.tanh %198 : vector<8x128xf32>
    %200 = arith.negf %198 : vector<8x128xf32>
    %201 = math.exp %200 : vector<8x128xf32>
    %cst_61 = arith.constant 1.000000e+00 : f32
    %202 = vector.broadcast %cst_61 : f32 to vector<8x128xf32>
    %203 = arith.addf %202, %201 : vector<8x128xf32>
    %204 = arith.divf %202, %203 : vector<8x128xf32>
    %205 = arith.select %54, %199, %204 : vector<8x128xi1>, vector<8x128xf32>
    %206 = vector.extract_strided_slice %205 {offsets = [0, 0], sizes = [8, 32], strides = [1, 1]} : vector<8x128xf32> to vector<8x32xf32>
    %207 = vector.extract_strided_slice %205 {offsets = [0, 32], sizes = [8, 32], strides = [1, 1]} : vector<8x128xf32> to vector<8x32xf32>
    %208 = vector.extract_strided_slice %205 {offsets = [0, 64], sizes = [8, 32], strides = [1, 1]} : vector<8x128xf32> to vector<8x32xf32>
    %209 = vector.extract_strided_slice %205 {offsets = [0, 96], sizes = [8, 32], strides = [1, 1]} : vector<8x128xf32> to vector<8x32xf32>
    %210 = arith.mulf %207, %166 : vector<8x32xf32>
    %211 = arith.mulf %206, %208 : vector<8x32xf32>
    %212 = arith.addf %210, %211 : vector<8x32xf32>
    %213 = math.tanh %212 : vector<8x32xf32>
    %214 = arith.mulf %209, %213 : vector<8x32xf32>
    %215 = vector.shape_cast %168 : vector<8x1xi1> to vector<8x1xi1>
    %216 = vector.broadcast %215 : vector<8x1xi1> to vector<8x32xi1>
    %217 = arith.select %216, %214, %163 : vector<8x32xi1>, vector<8x32xf32>
    %218 = vector.shape_cast %168 : vector<8x1xi1> to vector<8x1xi1>
    %219 = vector.broadcast %218 : vector<8x1xi1> to vector<8x32xi1>
    %220 = arith.select %219, %212, %166 : vector<8x32xi1>, vector<8x32xf32>
    %c3_i32 = arith.constant 3 : i32
    %221 = vector.broadcast %c3_i32 : i32 to vector<8x1xi32>
    %222 = arith.cmpi sgt, %48, %221 : vector<8x1xi32>
    %cst_62 = arith.constant dense<0.000000e+00> : vector<8x128xf32>
    %223 = tpu.matmul %190, %44, %cst_62 {dimension_numbers = #tpu.dot_dimension_numbers<[1], [0], [0], [1], [0, 0, 1, 1], [], []>} : vector<8x32xf32>, vector<32x128xf32>, vector<8x128xf32> -> vector<8x128xf32>
    %224 = vector.extract_strided_slice %43 {offsets = [24, 0], sizes = [8, 128], strides = [1, 1]} : vector<64x128xf32> to vector<8x128xf32>
    %225 = arith.addf %223, %224 : vector<8x128xf32>
    %226 = math.tanh %225 : vector<8x128xf32>
    %227 = arith.negf %225 : vector<8x128xf32>
    %228 = math.exp %227 : vector<8x128xf32>
    %cst_63 = arith.constant 1.000000e+00 : f32
    %229 = vector.broadcast %cst_63 : f32 to vector<8x128xf32>
    %230 = arith.addf %229, %228 : vector<8x128xf32>
    %231 = arith.divf %229, %230 : vector<8x128xf32>
    %232 = arith.select %54, %226, %231 : vector<8x128xi1>, vector<8x128xf32>
    %233 = vector.extract_strided_slice %232 {offsets = [0, 0], sizes = [8, 32], strides = [1, 1]} : vector<8x128xf32> to vector<8x32xf32>
    %234 = vector.extract_strided_slice %232 {offsets = [0, 32], sizes = [8, 32], strides = [1, 1]} : vector<8x128xf32> to vector<8x32xf32>
    %235 = vector.extract_strided_slice %232 {offsets = [0, 64], sizes = [8, 32], strides = [1, 1]} : vector<8x128xf32> to vector<8x32xf32>
    %236 = vector.extract_strided_slice %232 {offsets = [0, 96], sizes = [8, 32], strides = [1, 1]} : vector<8x128xf32> to vector<8x32xf32>
    %237 = arith.mulf %234, %193 : vector<8x32xf32>
    %238 = arith.mulf %233, %235 : vector<8x32xf32>
    %239 = arith.addf %237, %238 : vector<8x32xf32>
    %240 = math.tanh %239 : vector<8x32xf32>
    %241 = arith.mulf %236, %240 : vector<8x32xf32>
    %242 = vector.shape_cast %222 : vector<8x1xi1> to vector<8x1xi1>
    %243 = vector.broadcast %242 : vector<8x1xi1> to vector<8x32xi1>
    %244 = arith.select %243, %241, %190 : vector<8x32xi1>, vector<8x32xf32>
    %245 = vector.shape_cast %222 : vector<8x1xi1> to vector<8x1xi1>
    %246 = vector.broadcast %245 : vector<8x1xi1> to vector<8x32xi1>
    %247 = arith.select %246, %239, %193 : vector<8x32xi1>, vector<8x32xf32>
    %cst_64 = arith.constant dense<0.000000e+00> : vector<8x128xf32>
    %248 = tpu.matmul %244, %45, %cst_64 {dimension_numbers = #tpu.dot_dimension_numbers<[1], [0], [0], [1], [0, 0, 1, 1], [], []>} : vector<8x32xf32>, vector<32x128xf32>, vector<8x128xf32> -> vector<8x128xf32>
    %cst_65 = arith.constant dense<0.000000e+00> : vector<8x128xf32>
    %249 = tpu.matmul %217, %46, %cst_65 {dimension_numbers = #tpu.dot_dimension_numbers<[1], [0], [0], [1], [0, 0, 1, 1], [], []>} : vector<8x32xf32>, vector<32x128xf32>, vector<8x128xf32> -> vector<8x128xf32>
    %250 = arith.addf %248, %249 : vector<8x128xf32>
    %251 = vector.broadcast %47 : vector<1x128xf32> to vector<8x128xf32>
    %252 = arith.addf %250, %251 : vector<8x128xf32>
    %253 = math.tanh %252 : vector<8x128xf32>
    %254 = arith.negf %252 : vector<8x128xf32>
    %255 = math.exp %254 : vector<8x128xf32>
    %cst_66 = arith.constant 1.000000e+00 : f32
    %256 = vector.broadcast %cst_66 : f32 to vector<8x128xf32>
    %257 = arith.addf %256, %255 : vector<8x128xf32>
    %258 = arith.divf %256, %257 : vector<8x128xf32>
    %259 = arith.select %54, %253, %258 : vector<8x128xi1>, vector<8x128xf32>
    %260 = vector.extract_strided_slice %259 {offsets = [0, 0], sizes = [8, 32], strides = [1, 1]} : vector<8x128xf32> to vector<8x32xf32>
    %261 = vector.extract_strided_slice %259 {offsets = [0, 32], sizes = [8, 32], strides = [1, 1]} : vector<8x128xf32> to vector<8x32xf32>
    %262 = vector.extract_strided_slice %259 {offsets = [0, 64], sizes = [8, 32], strides = [1, 1]} : vector<8x128xf32> to vector<8x32xf32>
    %263 = vector.extract_strided_slice %259 {offsets = [0, 96], sizes = [8, 32], strides = [1, 1]} : vector<8x128xf32> to vector<8x32xf32>
    %264 = arith.mulf %261, %220 : vector<8x32xf32>
    %265 = arith.mulf %260, %262 : vector<8x32xf32>
    %266 = arith.addf %264, %265 : vector<8x32xf32>
    %267 = math.tanh %266 : vector<8x32xf32>
    %268 = arith.mulf %263, %267 : vector<8x32xf32>
    %269 = vector.shape_cast %222 : vector<8x1xi1> to vector<8x1xi1>
    %270 = vector.broadcast %269 : vector<8x1xi1> to vector<8x32xi1>
    %271 = arith.select %270, %268, %217 : vector<8x32xi1>, vector<8x32xf32>
    %272 = vector.shape_cast %222 : vector<8x1xi1> to vector<8x1xi1>
    %273 = vector.broadcast %272 : vector<8x1xi1> to vector<8x32xi1>
    %274 = arith.select %273, %266, %220 : vector<8x32xi1>, vector<8x32xf32>
    %c4_i32 = arith.constant 4 : i32
    %275 = vector.broadcast %c4_i32 : i32 to vector<8x1xi32>
    %276 = arith.cmpi sgt, %48, %275 : vector<8x1xi32>
    %cst_67 = arith.constant dense<0.000000e+00> : vector<8x128xf32>
    %277 = tpu.matmul %244, %44, %cst_67 {dimension_numbers = #tpu.dot_dimension_numbers<[1], [0], [0], [1], [0, 0, 1, 1], [], []>} : vector<8x32xf32>, vector<32x128xf32>, vector<8x128xf32> -> vector<8x128xf32>
    %278 = vector.extract_strided_slice %43 {offsets = [32, 0], sizes = [8, 128], strides = [1, 1]} : vector<64x128xf32> to vector<8x128xf32>
    %279 = arith.addf %277, %278 : vector<8x128xf32>
    %280 = math.tanh %279 : vector<8x128xf32>
    %281 = arith.negf %279 : vector<8x128xf32>
    %282 = math.exp %281 : vector<8x128xf32>
    %cst_68 = arith.constant 1.000000e+00 : f32
    %283 = vector.broadcast %cst_68 : f32 to vector<8x128xf32>
    %284 = arith.addf %283, %282 : vector<8x128xf32>
    %285 = arith.divf %283, %284 : vector<8x128xf32>
    %286 = arith.select %54, %280, %285 : vector<8x128xi1>, vector<8x128xf32>
    %287 = vector.extract_strided_slice %286 {offsets = [0, 0], sizes = [8, 32], strides = [1, 1]} : vector<8x128xf32> to vector<8x32xf32>
    %288 = vector.extract_strided_slice %286 {offsets = [0, 32], sizes = [8, 32], strides = [1, 1]} : vector<8x128xf32> to vector<8x32xf32>
    %289 = vector.extract_strided_slice %286 {offsets = [0, 64], sizes = [8, 32], strides = [1, 1]} : vector<8x128xf32> to vector<8x32xf32>
    %290 = vector.extract_strided_slice %286 {offsets = [0, 96], sizes = [8, 32], strides = [1, 1]} : vector<8x128xf32> to vector<8x32xf32>
    %291 = arith.mulf %288, %247 : vector<8x32xf32>
    %292 = arith.mulf %287, %289 : vector<8x32xf32>
    %293 = arith.addf %291, %292 : vector<8x32xf32>
    %294 = math.tanh %293 : vector<8x32xf32>
    %295 = arith.mulf %290, %294 : vector<8x32xf32>
    %296 = vector.shape_cast %276 : vector<8x1xi1> to vector<8x1xi1>
    %297 = vector.broadcast %296 : vector<8x1xi1> to vector<8x32xi1>
    %298 = arith.select %297, %295, %244 : vector<8x32xi1>, vector<8x32xf32>
    %299 = vector.shape_cast %276 : vector<8x1xi1> to vector<8x1xi1>
    %300 = vector.broadcast %299 : vector<8x1xi1> to vector<8x32xi1>
    %301 = arith.select %300, %293, %247 : vector<8x32xi1>, vector<8x32xf32>
    %cst_69 = arith.constant dense<0.000000e+00> : vector<8x128xf32>
    %302 = tpu.matmul %298, %45, %cst_69 {dimension_numbers = #tpu.dot_dimension_numbers<[1], [0], [0], [1], [0, 0, 1, 1], [], []>} : vector<8x32xf32>, vector<32x128xf32>, vector<8x128xf32> -> vector<8x128xf32>
    %cst_70 = arith.constant dense<0.000000e+00> : vector<8x128xf32>
    %303 = tpu.matmul %271, %46, %cst_70 {dimension_numbers = #tpu.dot_dimension_numbers<[1], [0], [0], [1], [0, 0, 1, 1], [], []>} : vector<8x32xf32>, vector<32x128xf32>, vector<8x128xf32> -> vector<8x128xf32>
    %304 = arith.addf %302, %303 : vector<8x128xf32>
    %305 = vector.broadcast %47 : vector<1x128xf32> to vector<8x128xf32>
    %306 = arith.addf %304, %305 : vector<8x128xf32>
    %307 = math.tanh %306 : vector<8x128xf32>
    %308 = arith.negf %306 : vector<8x128xf32>
    %309 = math.exp %308 : vector<8x128xf32>
    %cst_71 = arith.constant 1.000000e+00 : f32
    %310 = vector.broadcast %cst_71 : f32 to vector<8x128xf32>
    %311 = arith.addf %310, %309 : vector<8x128xf32>
    %312 = arith.divf %310, %311 : vector<8x128xf32>
    %313 = arith.select %54, %307, %312 : vector<8x128xi1>, vector<8x128xf32>
    %314 = vector.extract_strided_slice %313 {offsets = [0, 0], sizes = [8, 32], strides = [1, 1]} : vector<8x128xf32> to vector<8x32xf32>
    %315 = vector.extract_strided_slice %313 {offsets = [0, 32], sizes = [8, 32], strides = [1, 1]} : vector<8x128xf32> to vector<8x32xf32>
    %316 = vector.extract_strided_slice %313 {offsets = [0, 64], sizes = [8, 32], strides = [1, 1]} : vector<8x128xf32> to vector<8x32xf32>
    %317 = vector.extract_strided_slice %313 {offsets = [0, 96], sizes = [8, 32], strides = [1, 1]} : vector<8x128xf32> to vector<8x32xf32>
    %318 = arith.mulf %315, %274 : vector<8x32xf32>
    %319 = arith.mulf %314, %316 : vector<8x32xf32>
    %320 = arith.addf %318, %319 : vector<8x32xf32>
    %321 = math.tanh %320 : vector<8x32xf32>
    %322 = arith.mulf %317, %321 : vector<8x32xf32>
    %323 = vector.shape_cast %276 : vector<8x1xi1> to vector<8x1xi1>
    %324 = vector.broadcast %323 : vector<8x1xi1> to vector<8x32xi1>
    %325 = arith.select %324, %322, %271 : vector<8x32xi1>, vector<8x32xf32>
    %326 = vector.shape_cast %276 : vector<8x1xi1> to vector<8x1xi1>
    %327 = vector.broadcast %326 : vector<8x1xi1> to vector<8x32xi1>
    %328 = arith.select %327, %320, %274 : vector<8x32xi1>, vector<8x32xf32>
    %c5_i32 = arith.constant 5 : i32
    %329 = vector.broadcast %c5_i32 : i32 to vector<8x1xi32>
    %330 = arith.cmpi sgt, %48, %329 : vector<8x1xi32>
    %cst_72 = arith.constant dense<0.000000e+00> : vector<8x128xf32>
    %331 = tpu.matmul %298, %44, %cst_72 {dimension_numbers = #tpu.dot_dimension_numbers<[1], [0], [0], [1], [0, 0, 1, 1], [], []>} : vector<8x32xf32>, vector<32x128xf32>, vector<8x128xf32> -> vector<8x128xf32>
    %332 = vector.extract_strided_slice %43 {offsets = [40, 0], sizes = [8, 128], strides = [1, 1]} : vector<64x128xf32> to vector<8x128xf32>
    %333 = arith.addf %331, %332 : vector<8x128xf32>
    %334 = math.tanh %333 : vector<8x128xf32>
    %335 = arith.negf %333 : vector<8x128xf32>
    %336 = math.exp %335 : vector<8x128xf32>
    %cst_73 = arith.constant 1.000000e+00 : f32
    %337 = vector.broadcast %cst_73 : f32 to vector<8x128xf32>
    %338 = arith.addf %337, %336 : vector<8x128xf32>
    %339 = arith.divf %337, %338 : vector<8x128xf32>
    %340 = arith.select %54, %334, %339 : vector<8x128xi1>, vector<8x128xf32>
    %341 = vector.extract_strided_slice %340 {offsets = [0, 0], sizes = [8, 32], strides = [1, 1]} : vector<8x128xf32> to vector<8x32xf32>
    %342 = vector.extract_strided_slice %340 {offsets = [0, 32], sizes = [8, 32], strides = [1, 1]} : vector<8x128xf32> to vector<8x32xf32>
    %343 = vector.extract_strided_slice %340 {offsets = [0, 64], sizes = [8, 32], strides = [1, 1]} : vector<8x128xf32> to vector<8x32xf32>
    %344 = vector.extract_strided_slice %340 {offsets = [0, 96], sizes = [8, 32], strides = [1, 1]} : vector<8x128xf32> to vector<8x32xf32>
    %345 = arith.mulf %342, %301 : vector<8x32xf32>
    %346 = arith.mulf %341, %343 : vector<8x32xf32>
    %347 = arith.addf %345, %346 : vector<8x32xf32>
    %348 = math.tanh %347 : vector<8x32xf32>
    %349 = arith.mulf %344, %348 : vector<8x32xf32>
    %350 = vector.shape_cast %330 : vector<8x1xi1> to vector<8x1xi1>
    %351 = vector.broadcast %350 : vector<8x1xi1> to vector<8x32xi1>
    %352 = arith.select %351, %349, %298 : vector<8x32xi1>, vector<8x32xf32>
    %353 = vector.shape_cast %330 : vector<8x1xi1> to vector<8x1xi1>
    %354 = vector.broadcast %353 : vector<8x1xi1> to vector<8x32xi1>
    %355 = arith.select %354, %347, %301 : vector<8x32xi1>, vector<8x32xf32>
    %cst_74 = arith.constant dense<0.000000e+00> : vector<8x128xf32>
    %356 = tpu.matmul %352, %45, %cst_74 {dimension_numbers = #tpu.dot_dimension_numbers<[1], [0], [0], [1], [0, 0, 1, 1], [], []>} : vector<8x32xf32>, vector<32x128xf32>, vector<8x128xf32> -> vector<8x128xf32>
    %cst_75 = arith.constant dense<0.000000e+00> : vector<8x128xf32>
    %357 = tpu.matmul %325, %46, %cst_75 {dimension_numbers = #tpu.dot_dimension_numbers<[1], [0], [0], [1], [0, 0, 1, 1], [], []>} : vector<8x32xf32>, vector<32x128xf32>, vector<8x128xf32> -> vector<8x128xf32>
    %358 = arith.addf %356, %357 : vector<8x128xf32>
    %359 = vector.broadcast %47 : vector<1x128xf32> to vector<8x128xf32>
    %360 = arith.addf %358, %359 : vector<8x128xf32>
    %361 = math.tanh %360 : vector<8x128xf32>
    %362 = arith.negf %360 : vector<8x128xf32>
    %363 = math.exp %362 : vector<8x128xf32>
    %cst_76 = arith.constant 1.000000e+00 : f32
    %364 = vector.broadcast %cst_76 : f32 to vector<8x128xf32>
    %365 = arith.addf %364, %363 : vector<8x128xf32>
    %366 = arith.divf %364, %365 : vector<8x128xf32>
    %367 = arith.select %54, %361, %366 : vector<8x128xi1>, vector<8x128xf32>
    %368 = vector.extract_strided_slice %367 {offsets = [0, 0], sizes = [8, 32], strides = [1, 1]} : vector<8x128xf32> to vector<8x32xf32>
    %369 = vector.extract_strided_slice %367 {offsets = [0, 32], sizes = [8, 32], strides = [1, 1]} : vector<8x128xf32> to vector<8x32xf32>
    %370 = vector.extract_strided_slice %367 {offsets = [0, 64], sizes = [8, 32], strides = [1, 1]} : vector<8x128xf32> to vector<8x32xf32>
    %371 = vector.extract_strided_slice %367 {offsets = [0, 96], sizes = [8, 32], strides = [1, 1]} : vector<8x128xf32> to vector<8x32xf32>
    %372 = arith.mulf %369, %328 : vector<8x32xf32>
    %373 = arith.mulf %368, %370 : vector<8x32xf32>
    %374 = arith.addf %372, %373 : vector<8x32xf32>
    %375 = math.tanh %374 : vector<8x32xf32>
    %376 = arith.mulf %371, %375 : vector<8x32xf32>
    %377 = vector.shape_cast %330 : vector<8x1xi1> to vector<8x1xi1>
    %378 = vector.broadcast %377 : vector<8x1xi1> to vector<8x32xi1>
    %379 = arith.select %378, %376, %325 : vector<8x32xi1>, vector<8x32xf32>
    %380 = vector.shape_cast %330 : vector<8x1xi1> to vector<8x1xi1>
    %381 = vector.broadcast %380 : vector<8x1xi1> to vector<8x32xi1>
    %382 = arith.select %381, %374, %328 : vector<8x32xi1>, vector<8x32xf32>
    %c6_i32 = arith.constant 6 : i32
    %383 = vector.broadcast %c6_i32 : i32 to vector<8x1xi32>
    %384 = arith.cmpi sgt, %48, %383 : vector<8x1xi32>
    %cst_77 = arith.constant dense<0.000000e+00> : vector<8x128xf32>
    %385 = tpu.matmul %352, %44, %cst_77 {dimension_numbers = #tpu.dot_dimension_numbers<[1], [0], [0], [1], [0, 0, 1, 1], [], []>} : vector<8x32xf32>, vector<32x128xf32>, vector<8x128xf32> -> vector<8x128xf32>
    %386 = vector.extract_strided_slice %43 {offsets = [48, 0], sizes = [8, 128], strides = [1, 1]} : vector<64x128xf32> to vector<8x128xf32>
    %387 = arith.addf %385, %386 : vector<8x128xf32>
    %388 = math.tanh %387 : vector<8x128xf32>
    %389 = arith.negf %387 : vector<8x128xf32>
    %390 = math.exp %389 : vector<8x128xf32>
    %cst_78 = arith.constant 1.000000e+00 : f32
    %391 = vector.broadcast %cst_78 : f32 to vector<8x128xf32>
    %392 = arith.addf %391, %390 : vector<8x128xf32>
    %393 = arith.divf %391, %392 : vector<8x128xf32>
    %394 = arith.select %54, %388, %393 : vector<8x128xi1>, vector<8x128xf32>
    %395 = vector.extract_strided_slice %394 {offsets = [0, 0], sizes = [8, 32], strides = [1, 1]} : vector<8x128xf32> to vector<8x32xf32>
    %396 = vector.extract_strided_slice %394 {offsets = [0, 32], sizes = [8, 32], strides = [1, 1]} : vector<8x128xf32> to vector<8x32xf32>
    %397 = vector.extract_strided_slice %394 {offsets = [0, 64], sizes = [8, 32], strides = [1, 1]} : vector<8x128xf32> to vector<8x32xf32>
    %398 = vector.extract_strided_slice %394 {offsets = [0, 96], sizes = [8, 32], strides = [1, 1]} : vector<8x128xf32> to vector<8x32xf32>
    %399 = arith.mulf %396, %355 : vector<8x32xf32>
    %400 = arith.mulf %395, %397 : vector<8x32xf32>
    %401 = arith.addf %399, %400 : vector<8x32xf32>
    %402 = math.tanh %401 : vector<8x32xf32>
    %403 = arith.mulf %398, %402 : vector<8x32xf32>
    %404 = vector.shape_cast %384 : vector<8x1xi1> to vector<8x1xi1>
    %405 = vector.broadcast %404 : vector<8x1xi1> to vector<8x32xi1>
    %406 = arith.select %405, %403, %352 : vector<8x32xi1>, vector<8x32xf32>
    %407 = vector.shape_cast %384 : vector<8x1xi1> to vector<8x1xi1>
    %408 = vector.broadcast %407 : vector<8x1xi1> to vector<8x32xi1>
    %409 = arith.select %408, %401, %355 : vector<8x32xi1>, vector<8x32xf32>
    %cst_79 = arith.constant dense<0.000000e+00> : vector<8x128xf32>
    %410 = tpu.matmul %406, %45, %cst_79 {dimension_numbers = #tpu.dot_dimension_numbers<[1], [0], [0], [1], [0, 0, 1, 1], [], []>} : vector<8x32xf32>, vector<32x128xf32>, vector<8x128xf32> -> vector<8x128xf32>
    %cst_80 = arith.constant dense<0.000000e+00> : vector<8x128xf32>
    %411 = tpu.matmul %379, %46, %cst_80 {dimension_numbers = #tpu.dot_dimension_numbers<[1], [0], [0], [1], [0, 0, 1, 1], [], []>} : vector<8x32xf32>, vector<32x128xf32>, vector<8x128xf32> -> vector<8x128xf32>
    %412 = arith.addf %410, %411 : vector<8x128xf32>
    %413 = vector.broadcast %47 : vector<1x128xf32> to vector<8x128xf32>
    %414 = arith.addf %412, %413 : vector<8x128xf32>
    %415 = math.tanh %414 : vector<8x128xf32>
    %416 = arith.negf %414 : vector<8x128xf32>
    %417 = math.exp %416 : vector<8x128xf32>
    %cst_81 = arith.constant 1.000000e+00 : f32
    %418 = vector.broadcast %cst_81 : f32 to vector<8x128xf32>
    %419 = arith.addf %418, %417 : vector<8x128xf32>
    %420 = arith.divf %418, %419 : vector<8x128xf32>
    %421 = arith.select %54, %415, %420 : vector<8x128xi1>, vector<8x128xf32>
    %422 = vector.extract_strided_slice %421 {offsets = [0, 0], sizes = [8, 32], strides = [1, 1]} : vector<8x128xf32> to vector<8x32xf32>
    %423 = vector.extract_strided_slice %421 {offsets = [0, 32], sizes = [8, 32], strides = [1, 1]} : vector<8x128xf32> to vector<8x32xf32>
    %424 = vector.extract_strided_slice %421 {offsets = [0, 64], sizes = [8, 32], strides = [1, 1]} : vector<8x128xf32> to vector<8x32xf32>
    %425 = vector.extract_strided_slice %421 {offsets = [0, 96], sizes = [8, 32], strides = [1, 1]} : vector<8x128xf32> to vector<8x32xf32>
    %426 = arith.mulf %423, %382 : vector<8x32xf32>
    %427 = arith.mulf %422, %424 : vector<8x32xf32>
    %428 = arith.addf %426, %427 : vector<8x32xf32>
    %429 = math.tanh %428 : vector<8x32xf32>
    %430 = arith.mulf %425, %429 : vector<8x32xf32>
    %431 = vector.shape_cast %384 : vector<8x1xi1> to vector<8x1xi1>
    %432 = vector.broadcast %431 : vector<8x1xi1> to vector<8x32xi1>
    %433 = arith.select %432, %430, %379 : vector<8x32xi1>, vector<8x32xf32>
    %434 = vector.shape_cast %384 : vector<8x1xi1> to vector<8x1xi1>
    %435 = vector.broadcast %434 : vector<8x1xi1> to vector<8x32xi1>
    %436 = arith.select %435, %428, %382 : vector<8x32xi1>, vector<8x32xf32>
    %c7_i32 = arith.constant 7 : i32
    %437 = vector.broadcast %c7_i32 : i32 to vector<8x1xi32>
    %438 = arith.cmpi sgt, %48, %437 : vector<8x1xi32>
    %cst_82 = arith.constant dense<0.000000e+00> : vector<8x128xf32>
    %439 = tpu.matmul %406, %44, %cst_82 {dimension_numbers = #tpu.dot_dimension_numbers<[1], [0], [0], [1], [0, 0, 1, 1], [], []>} : vector<8x32xf32>, vector<32x128xf32>, vector<8x128xf32> -> vector<8x128xf32>
    %440 = vector.extract_strided_slice %43 {offsets = [56, 0], sizes = [8, 128], strides = [1, 1]} : vector<64x128xf32> to vector<8x128xf32>
    %441 = arith.addf %439, %440 : vector<8x128xf32>
    %442 = math.tanh %441 : vector<8x128xf32>
    %443 = arith.negf %441 : vector<8x128xf32>
    %444 = math.exp %443 : vector<8x128xf32>
    %cst_83 = arith.constant 1.000000e+00 : f32
    %445 = vector.broadcast %cst_83 : f32 to vector<8x128xf32>
    %446 = arith.addf %445, %444 : vector<8x128xf32>
    %447 = arith.divf %445, %446 : vector<8x128xf32>
    %448 = arith.select %54, %442, %447 : vector<8x128xi1>, vector<8x128xf32>
    %449 = vector.extract_strided_slice %448 {offsets = [0, 0], sizes = [8, 32], strides = [1, 1]} : vector<8x128xf32> to vector<8x32xf32>
    %450 = vector.extract_strided_slice %448 {offsets = [0, 32], sizes = [8, 32], strides = [1, 1]} : vector<8x128xf32> to vector<8x32xf32>
    %451 = vector.extract_strided_slice %448 {offsets = [0, 64], sizes = [8, 32], strides = [1, 1]} : vector<8x128xf32> to vector<8x32xf32>
    %452 = vector.extract_strided_slice %448 {offsets = [0, 96], sizes = [8, 32], strides = [1, 1]} : vector<8x128xf32> to vector<8x32xf32>
    %453 = arith.mulf %450, %409 : vector<8x32xf32>
    %454 = arith.mulf %449, %451 : vector<8x32xf32>
    %455 = arith.addf %453, %454 : vector<8x32xf32>
    %456 = math.tanh %455 : vector<8x32xf32>
    %457 = arith.mulf %452, %456 : vector<8x32xf32>
    %458 = vector.shape_cast %438 : vector<8x1xi1> to vector<8x1xi1>
    %459 = vector.broadcast %458 : vector<8x1xi1> to vector<8x32xi1>
    %460 = arith.select %459, %457, %406 : vector<8x32xi1>, vector<8x32xf32>
    %cst_84 = arith.constant dense<0.000000e+00> : vector<8x128xf32>
    %461 = tpu.matmul %460, %45, %cst_84 {dimension_numbers = #tpu.dot_dimension_numbers<[1], [0], [0], [1], [0, 0, 1, 1], [], []>} : vector<8x32xf32>, vector<32x128xf32>, vector<8x128xf32> -> vector<8x128xf32>
    %cst_85 = arith.constant dense<0.000000e+00> : vector<8x128xf32>
    %462 = tpu.matmul %433, %46, %cst_85 {dimension_numbers = #tpu.dot_dimension_numbers<[1], [0], [0], [1], [0, 0, 1, 1], [], []>} : vector<8x32xf32>, vector<32x128xf32>, vector<8x128xf32> -> vector<8x128xf32>
    %463 = arith.addf %461, %462 : vector<8x128xf32>
    %464 = vector.broadcast %47 : vector<1x128xf32> to vector<8x128xf32>
    %465 = arith.addf %463, %464 : vector<8x128xf32>
    %466 = math.tanh %465 : vector<8x128xf32>
    %467 = arith.negf %465 : vector<8x128xf32>
    %468 = math.exp %467 : vector<8x128xf32>
    %cst_86 = arith.constant 1.000000e+00 : f32
    %469 = vector.broadcast %cst_86 : f32 to vector<8x128xf32>
    %470 = arith.addf %469, %468 : vector<8x128xf32>
    %471 = arith.divf %469, %470 : vector<8x128xf32>
    %472 = arith.select %54, %466, %471 : vector<8x128xi1>, vector<8x128xf32>
    %473 = vector.extract_strided_slice %472 {offsets = [0, 0], sizes = [8, 32], strides = [1, 1]} : vector<8x128xf32> to vector<8x32xf32>
    %474 = vector.extract_strided_slice %472 {offsets = [0, 32], sizes = [8, 32], strides = [1, 1]} : vector<8x128xf32> to vector<8x32xf32>
    %475 = vector.extract_strided_slice %472 {offsets = [0, 64], sizes = [8, 32], strides = [1, 1]} : vector<8x128xf32> to vector<8x32xf32>
    %476 = vector.extract_strided_slice %472 {offsets = [0, 96], sizes = [8, 32], strides = [1, 1]} : vector<8x128xf32> to vector<8x32xf32>
    %477 = arith.mulf %474, %436 : vector<8x32xf32>
    %478 = arith.mulf %473, %475 : vector<8x32xf32>
    %479 = arith.addf %477, %478 : vector<8x32xf32>
    %480 = math.tanh %479 : vector<8x32xf32>
    %481 = arith.mulf %476, %480 : vector<8x32xf32>
    %482 = vector.shape_cast %438 : vector<8x1xi1> to vector<8x1xi1>
    %483 = vector.broadcast %482 : vector<8x1xi1> to vector<8x32xi1>
    %484 = arith.select %483, %481, %433 : vector<8x32xi1>, vector<8x32xf32>
    %c0_87 = arith.constant 0 : index
    %c0_88 = arith.constant 0 : index
    %485 = vector.load %arg12[%c0_87, %c0_88] : memref<32x128xf32, #tpu.memory_space<vmem>>, vector<32x128xf32>
    %cst_89 = arith.constant dense<0.000000e+00> : vector<8x128xf32>
    %486 = tpu.matmul %484, %485, %cst_89 {dimension_numbers = #tpu.dot_dimension_numbers<[1], [0], [0], [1], [0, 0, 1, 1], [], []>} : vector<8x32xf32>, vector<32x128xf32>, vector<8x128xf32> -> vector<8x128xf32>
    %c0_90 = arith.constant 0 : index
    %c0_91 = arith.constant 0 : index
    %487 = vector.load %arg13[%c0_90, %c0_91] : memref<1x128xf32, #tpu.memory_space<vmem>>, vector<1x128xf32>
    %488 = vector.broadcast %487 : vector<1x128xf32> to vector<8x128xf32>
    %489 = arith.addf %486, %488 : vector<8x128xf32>
    %c0_92 = arith.constant 0 : index
    %c0_93 = arith.constant 0 : index
    %490 = vector.load %arg15[%c0_92, %c0_93] : memref<8x128xf32, #tpu.memory_space<vmem>>, vector<8x128xf32>
    tpu.vector_store %arg15[%c0_92, %c0_93], %489 {strides = array<i32>} : memref<8x128xf32, #tpu.memory_space<vmem>>, vector<8x128xf32>,
    return
  }
  func.func @transform_0(%arg0: i32) -> (i32, i32) {
    %c0_i32 = arith.constant 0 : i32
    %c0_i32_0 = arith.constant 0 : i32
    %c0_i32_1 = arith.constant 0 : i32
    return %c0_i32, %c0_i32_0 : i32, i32
  }
  func.func @transform_1(%arg0: i32) -> (i32, i32) {
    %c0_i32 = arith.constant 0 : i32
    %c0_i32_0 = arith.constant 0 : i32
    %c0_i32_1 = arith.constant 0 : i32
    return %c0_i32, %c0_i32_0 : i32, i32
  }
  func.func @transform_2(%arg0: i32) -> (i32, i32) {
    %c0_i32 = arith.constant 0 : i32
    %c0_i32_0 = arith.constant 0 : i32
    %c0_i32_1 = arith.constant 0 : i32
    return %c0_i32, %c0_i32_0 : i32, i32
  }
  func.func @transform_3(%arg0: i32) -> (i32, i32) {
    %c0_i32 = arith.constant 0 : i32
    %c0_i32_0 = arith.constant 0 : i32
    %c0_i32_1 = arith.constant 0 : i32
    return %c0_i32, %c0_i32_0 : i32, i32
  }
  func.func @transform_4(%arg0: i32) -> (i32, i32) {
    %c0_i32 = arith.constant 0 : i32
    %c0_i32_0 = arith.constant 0 : i32
    %c0_i32_1 = arith.constant 0 : i32
    return %c0_i32, %c0_i32_0 : i32, i32
  }
  func.func @transform_5(%arg0: i32) -> (i32, i32) {
    %c0_i32 = arith.constant 0 : i32
    %c0_i32_0 = arith.constant 0 : i32
    %c0_i32_1 = arith.constant 0 : i32
    return %c0_i32, %c0_i32_0 : i32, i32
  }
  func.func @transform_6(%arg0: i32) -> (i32, i32) {
    %c0_i32 = arith.constant 0 : i32
    %c0_i32_0 = arith.constant 0 : i32
    %c0_i32_1 = arith.constant 0 : i32
    return %c0_i32, %c0_i32_0 : i32, i32
  }
  func.func @transform_7(%arg0: i32) -> (i32, i32) {
    %c0_i32 = arith.constant 0 : i32
    %c0_i32_0 = arith.constant 0 : i32
    %c0_i32_1 = arith.constant 0 : i32
    return %c0_i32, %c0_i32_0 : i32, i32
  }
  func.func @transform_8(%arg0: i32) -> (i32, i32) {
    %c0_i32 = arith.constant 0 : i32
    %c0_i32_0 = arith.constant 0 : i32
    %c0_i32_1 = arith.constant 0 : i32
    return %c0_i32, %c0_i32_0 : i32, i32
  }
  func.func @transform_9(%arg0: i32) -> (i32, i32) {
    %c0_i32 = arith.constant 0 : i32
    %c0_i32_0 = arith.constant 0 : i32
    %c0_i32_1 = arith.constant 0 : i32
    return %c0_i32, %c0_i32_0 : i32, i32
  }
  func.func @transform_10(%arg0: i32) -> (i32, i32) {
    %c0_i32 = arith.constant 0 : i32
    %c0_i32_0 = arith.constant 0 : i32
    %c0_i32_1 = arith.constant 0 : i32
    return %c0_i32, %c0_i32_0 : i32, i32
  }
  func.func @transform_11(%arg0: i32) -> (i32, i32) {
    %c0_i32 = arith.constant 0 : i32
    %c0_i32_0 = arith.constant 0 : i32
    %c0_i32_1 = arith.constant 0 : i32
    return %c0_i32, %c0_i32_0 : i32, i32
  }
  func.func @transform_12(%arg0: i32) -> (i32, i32) {
    %c0_i32 = arith.constant 0 : i32
    %c0_i32_0 = arith.constant 0 : i32
    %c0_i32_1 = arith.constant 0 : i32
    return %c0_i32, %c0_i32_0 : i32, i32
  }
  func.func @transform_13(%arg0: i32) -> (i32, i32) {
    %c0_i32 = arith.constant 0 : i32
    %c0_i32_0 = arith.constant 0 : i32
    %c0_i32_1 = arith.constant 0 : i32
    return %c0_i32, %c0_i32_0 : i32, i32
  }
  func.func @transform_14(%arg0: i32) -> (i32, i32) {
    %c0_i32 = arith.constant 0 : i32
    %c0_i32_0 = arith.constant 0 : i32
    %c0_i32_1 = arith.constant 0 : i32
    return %c0_i32, %c0_i32_0 : i32, i32
  }
}

</mosaic_0001>

<llo_original>
// kernel: icassp1_cnn_forward.1
$region0: #{icassp1_cnn_forward.1}
  #allocation0 [shape = 'u32[]', space=smem, size = 0x4, offset = 0x4, fixed_abs, tag = 'smem constant byte address 0x4 - core index']
  #allocation1 [shape = 'u32[72,128]{1,0:T(1,128)}', space=vmem, size = 0x9000, scoped, tag = 'internal scratch']
  #allocation2 [shape = 'f32[64,96]{1,0:T(8,128)}', space=vmem, size = 0x8000, scoped, tag = 'scratch operand']
  %s0 = inlined_call_operand.vmem [shape: f32[64,32], index: 0, kind: input, shape index: {}]
  %s1 = inlined_call_operand.vmem [shape: f32[96,32], index: 1, kind: input, shape index: {}]
  %s2 = inlined_call_operand.vmem [shape: f32[1,32], index: 2, kind: input, shape index: {}]
  %s3 = inlined_call_operand.vmem [shape: f32[1,32], index: 3, kind: input, shape index: {}]
  %s4 = inlined_call_operand.vmem [shape: f32[1,32], index: 4, kind: input, shape index: {}]
  %s5 = inlined_call_operand.vmem [shape: f32[32,128], index: 5, kind: input, shape index: {}]
  %s6 = inlined_call_operand.vmem [shape: f32[32,128], index: 6, kind: input, shape index: {}]
  %s7 = inlined_call_operand.vmem [shape: f32[1,128], index: 7, kind: input, shape index: {}]
  %s8 = inlined_call_operand.vmem [shape: f32[32,128], index: 8, kind: input, shape index: {}]
  %s9 = inlined_call_operand.vmem [shape: f32[32,128], index: 9, kind: input, shape index: {}]
  %s10 = inlined_call_operand.vmem [shape: f32[1,128], index: 10, kind: input, shape index: {}]
  %s11 = inlined_call_operand.vmem [shape: f32[32,128], index: 11, kind: input, shape index: {}]
  %s12 = inlined_call_operand.vmem [shape: f32[1,128], index: 12, kind: input, shape index: {}]
  %s13 = inlined_call_operand.vmem [shape: s32[8,1], index: 13, kind: input, shape index: {}]
  %s14 = inlined_call_operand.hbm [shape: f32[8,128], index: 14, kind: output, shape index: {}]
  %s15 = sld [smem:[#allocation0]]
  $region66: #{icassp1_cnn_forward.1} parent=0
    _
  %s17 = ssub.s32 1, %s15
  %s18 = scalar_select 0, %s17, %s15
  $region1: #{icassp1_cnn_forward.1} parent=0
    #allocation3 [shape = 'u8[4096]{0}', space=vmem, size = 0x1000, scoped, tag = 'output window, operand 0, single buffered']
    #allocation4 [shape = 's32[1]{0}', space=sflag, size = 0x4, scoped, tag = 'scoped memory for icassp1_cnn_forward.1']
    %19 = vsyncpa [#allocation4], 0
    // Predicated region
    $region2: #{icassp1_cnn_forward.1} parent=1 // pred_check
      _
    $region3: #{icassp1_cnn_forward.1} parent=1 // pred_check_branch
      %21 = sbr.rel (0) target = $region5
    $region4: #{icassp1_cnn_forward.1} parent=1 // pred_region
      _
    $region5: #{icassp1_cnn_forward.1} parent=1 // pred_fallthru
      _
    // Predicated region
    $region6: #{icassp1_cnn_forward.1} parent=1 // pred_check
      _
    $region7: #{icassp1_cnn_forward.1} parent=1 // pred_check_branch
      %23 = sbr.rel (0) target = $region9
    $region8: #{icassp1_cnn_forward.1} parent=1 // pred_region
      _
    $region9: #{icassp1_cnn_forward.1} parent=1 // pred_fallthru
      _
    // Predicated region
    $region10: #{icassp1_cnn_forward.1} parent=1 // pred_check
      _
    $region11: #{icassp1_cnn_forward.1} parent=1 // pred_check_branch
      %25 = sbr.rel (0) target = $region13
    $region12: #{icassp1_cnn_forward.1} parent=1 // pred_region
      _
    $region13: #{icassp1_cnn_forward.1} parent=1 // pred_fallthru
      _
    // Predicated region
    $region14: #{icassp1_cnn_forward.1} parent=1 // pred_check
      _
    $region15: #{icassp1_cnn_forward.1} parent=1 // pred_check_branch
      %27 = sbr.rel (0) target = $region17
    $region16: #{icassp1_cnn_forward.1} parent=1 // pred_region
      _
    $region17: #{icassp1_cnn_forward.1} parent=1 // pred_fallthru
      _
    // Predicated region
    $region18: #{icassp1_cnn_forward.1} parent=1 // pred_check
      _
    $region19: #{icassp1_cnn_forward.1} parent=1 // pred_check_branch
      %29 = sbr.rel (0) target = $region21
    $region20: #{icassp1_cnn_forward.1} parent=1 // pred_region
      _
    $region21: #{icassp1_cnn_forward.1} parent=1 // pred_fallthru
      _
    // Predicated region
    $region22: #{icassp1_cnn_forward.1} parent=1 // pred_check
      _
    $region23: #{icassp1_cnn_forward.1} parent=1 // pred_check_branch
      %31 = sbr.rel (0) target = $region25
    $region24: #{icassp1_cnn_forward.1} parent=1 // pred_region
      _
    $region25: #{icassp1_cnn_forward.1} parent=1 // pred_fallthru
      _
    // Predicated region
    $region26: #{icassp1_cnn_forward.1} parent=1 // pred_check
      _
    $region27: #{icassp1_cnn_forward.1} parent=1 // pred_check_branch
      %33 = sbr.rel (0) target = $region29
    $region28: #{icassp1_cnn_forward.1} parent=1 // pred_region
      _
    $region29: #{icassp1_cnn_forward.1} parent=1 // pred_fallthru
      _
    // Predicated region
    $region30: #{icassp1_cnn_forward.1} parent=1 // pred_check
      _
    $region31: #{icassp1_cnn_forward.1} parent=1 // pred_check_branch
      %35 = sbr.rel (0) target = $region33
    $region32: #{icassp1_cnn_forward.1} parent=1 // pred_region
      _
    $region33: #{icassp1_cnn_forward.1} parent=1 // pred_fallthru
      _
    // Predicated region
    $region34: #{icassp1_cnn_forward.1} parent=1 // pred_check
      _
    $region35: #{icassp1_cnn_forward.1} parent=1 // pred_check_branch
      %37 = sbr.rel (0) target = $region37
    $region36: #{icassp1_cnn_forward.1} parent=1 // pred_region
      _
    $region37: #{icassp1_cnn_forward.1} parent=1 // pred_fallthru
      _
    // Predicated region
    $region38: #{icassp1_cnn_forward.1} parent=1 // pred_check
      _
    $region39: #{icassp1_cnn_forward.1} parent=1 // pred_check_branch
      %39 = sbr.rel (0) target = $region41
    $region40: #{icassp1_cnn_forward.1} parent=1 // pred_region
      _
    $region41: #{icassp1_cnn_forward.1} parent=1 // pred_fallthru
      _
    // Predicated region
    $region42: #{icassp1_cnn_forward.1} parent=1 // pred_check
      _
    $region43: #{icassp1_cnn_forward.1} parent=1 // pred_check_branch
      %41 = sbr.rel (0) target = $region45
    $region44: #{icassp1_cnn_forward.1} parent=1 // pred_region
      _
    $region45: #{icassp1_cnn_forward.1} parent=1 // pred_fallthru
      _
    // Predicated region
    $region46: #{icassp1_cnn_forward.1} parent=1 // pred_check
      _
    $region47: #{icassp1_cnn_forward.1} parent=1 // pred_check_branch
      %43 = sbr.rel (0) target = $region49
    $region48: #{icassp1_cnn_forward.1} parent=1 // pred_region
      _
    $region49: #{icassp1_cnn_forward.1} parent=1 // pred_fallthru
      _
    // Predicated region
    $region50: #{icassp1_cnn_forward.1} parent=1 // pred_check
      _
    $region51: #{icassp1_cnn_forward.1} parent=1 // pred_check_branch
      %45 = sbr.rel (0) target = $region53
    $region52: #{icassp1_cnn_forward.1} parent=1 // pred_region
      _
    $region53: #{icassp1_cnn_forward.1} parent=1 // pred_fallthru
      _
    // Predicated region
    $region54: #{icassp1_cnn_forward.1} parent=1 // pred_check
      _
    $region55: #{icassp1_cnn_forward.1} parent=1 // pred_check_branch
      %47 = sbr.rel (0) target = $region57
    $region56: #{icassp1_cnn_forward.1} parent=1 // pred_region
      _
    $region57: #{icassp1_cnn_forward.1} parent=1 // pred_fallthru
      _
    %vm48 = vcmask 261120
    %49 = vst.msk [vmem:[#allocation2] sm:$0xff] %vm48, 0.0
    %v50 = vld [vmem:[%s0] sm:$0xff]
    %v51 = vld [vmem:[%s0 + $0x8] sm:$0xff]
    %v52 = vld [vmem:[%s0 + $0x10] sm:$0xff]
    %v53 = vld [vmem:[%s0 + $0x18] sm:$0xff]
    %v54 = vld [vmem:[%s0 + $0x20] sm:$0xff]
    %v55 = vld [vmem:[%s0 + $0x28] sm:$0xff]
    %v56 = vld [vmem:[%s0 + $0x30] sm:$0xff]
    %57 = vst.msk [vmem:[#allocation2 + $0x8] sm:$0xff] %vm48, %v50
    %58 = vst.msk [vmem:[#allocation2 + $0x10] sm:$0xff] %vm48, %v51
    %59 = vst.msk [vmem:[#allocation2 + $0x18] sm:$0xff] %vm48, %v52
    %60 = vst.msk [vmem:[#allocation2 + $0x20] sm:$0xff] %vm48, %v53
    %61 = vst.msk [vmem:[#allocation2 + $0x28] sm:$0xff] %vm48, %v54
    %62 = vst.msk [vmem:[#allocation2 + $0x30] sm:$0xff] %vm48, %v55
    %63 = vst.msk [vmem:[#allocation2 + $0x38] sm:$0xff] %vm48, %v56
    %v64 = vld [vmem:[%s0] sm:$0xff]
    %v65 = vld [vmem:[%s0 + $0x8] sm:$0xff]
    %v66 = vld [vmem:[%s0 + $0x10] sm:$0xff]
    %v67 = vld [vmem:[%s0 + $0x18] sm:$0xff]
    %v68 = vld [vmem:[%s0 + $0x20] sm:$0xff]
    %v69 = vld [vmem:[%s0 + $0x28] sm:$0xff]
    %v70 = vld [vmem:[%s0 + $0x30] sm:$0xff]
    %v71 = vld [vmem:[%s0 + $0x38] sm:$0xff]
    %80 = vrot.lane.b32.xlu0 %v64, 32
    %v81 = vpop.permute.xlu0 %80
    %82 = vrot.lane.b32.xlu0 %v65, 32
    %v83 = vpop.permute.xlu0 %82
    %84 = vrot.lane.b32.xlu0 %v66, 32
    %v85 = vpop.permute.xlu0 %84
    %86 = vrot.lane.b32.xlu0 %v67, 32
    %v87 = vpop.permute.xlu0 %86
    %88 = vrot.lane.b32.xlu0 %v68, 32
    %v89 = vpop.permute.xlu0 %88
    %90 = vrot.lane.b32.xlu0 %v69, 32
    %v91 = vpop.permute.xlu0 %90
    %92 = vrot.lane.b32.xlu0 %v70, 32
    %v93 = vpop.permute.xlu0 %92
    %94 = vrot.lane.b32.xlu0 %v71, 32
    %v95 = vpop.permute.xlu0 %94
    %vm104 = vcmask 523520
    %105 = vst.msk [vmem:[#allocation2] sm:$0xff] %vm104, %v81
    %106 = vst.msk [vmem:[#allocation2 + $0x8] sm:$0xff] %vm104, %v83
    %107 = vst.msk [vmem:[#allocation2 + $0x10] sm:$0xff] %vm104, %v85
    %108 = vst.msk [vmem:[#allocation2 + $0x18] sm:$0xff] %vm104, %v87
    %109 = vst.msk [vmem:[#allocation2 + $0x20] sm:$0xff] %vm104, %v89
    %110 = vst.msk [vmem:[#allocation2 + $0x28] sm:$0xff] %vm104, %v91
    %111 = vst.msk [vmem:[#allocation2 + $0x30] sm:$0xff] %vm104, %v93
    %112 = vst.msk [vmem:[#allocation2 + $0x38] sm:$0xff] %vm104, %v95
    %v113 = vld [vmem:[%s0 + $0x8] sm:$0xff]
    %v114 = vld [vmem:[%s0 + $0x10] sm:$0xff]
    %v115 = vld [vmem:[%s0 + $0x18] sm:$0xff]
    %v116 = vld [vmem:[%s0 + $0x20] sm:$0xff]
    %v117 = vld [vmem:[%s0 + $0x28] sm:$0xff]
    %v118 = vld [vmem:[%s0 + $0x30] sm:$0xff]
    %v119 = vld [vmem:[%s0 + $0x38] sm:$0xff]
    %127 = vrot.lane.b32.xlu0 %v113, 64
    %v128 = vpop.permute.xlu0 %127
    %129 = vrot.lane.b32.xlu0 %v114, 64
    %v130 = vpop.permute.xlu0 %129
    %131 = vrot.lane.b32.xlu0 %v115, 64
    %v132 = vpop.permute.xlu0 %131
    %133 = vrot.lane.b32.xlu0 %v116, 64
    %v134 = vpop.permute.xlu0 %133
    %135 = vrot.lane.b32.xlu0 %v117, 64
    %v136 = vpop.permute.xlu0 %135
    %137 = vrot.lane.b32.xlu0 %v118, 64
    %v138 = vpop.permute.xlu0 %137
    %139 = vrot.lane.b32.xlu0 %v119, 64
    %v140 = vpop.permute.xlu0 %139
    %vm148 = vcmask 785920
    %149 = vst.msk [vmem:[#allocation2] sm:$0xff] %vm148, %v128
    %150 = vst.msk [vmem:[#allocation2 + $0x8] sm:$0xff] %vm148, %v130
    %151 = vst.msk [vmem:[#allocation2 + $0x10] sm:$0xff] %vm148, %v132
    %152 = vst.msk [vmem:[#allocation2 + $0x18] sm:$0xff] %vm148, %v134
    %153 = vst.msk [vmem:[#allocation2 + $0x20] sm:$0xff] %vm148, %v136
    %154 = vst.msk [vmem:[#allocation2 + $0x28] sm:$0xff] %vm148, %v138
    %155 = vst.msk [vmem:[#allocation2 + $0x30] sm:$0xff] %vm148, %v140
    %156 = vst.msk [vmem:[#allocation2 + $0x38] sm:$0xff] %vm148, 0.0
    %v157 = vld [vmem:[#allocation2] sm:$0xff]
    %v158 = vld [vmem:[#allocation2 + $0x8] sm:$0xff]
    %v159 = vld [vmem:[#allocation2 + $0x10] sm:$0xff]
    %v160 = vld [vmem:[#allocation2 + $0x18] sm:$0xff]
    %v161 = vld [vmem:[#allocation2 + $0x20] sm:$0xff]
    %v162 = vld [vmem:[#allocation2 + $0x28] sm:$0xff]
    %v163 = vld [vmem:[#allocation2 + $0x30] sm:$0xff]
    %v164 = vld [vmem:[#allocation2 + $0x38] sm:$0xff]
    %v165 = vld [vmem:[%s1] sm:$0xff]
    %v166 = vld [vmem:[%s1 + $0x8] sm:$0xff]
    %v167 = vld [vmem:[%s1 + $0x10] sm:$0xff]
    %v168 = vld [vmem:[%s1 + $0x18] sm:$0xff]
    %v169 = vld [vmem:[%s1 + $0x20] sm:$0xff]
    %v170 = vld [vmem:[%s1 + $0x28] sm:$0xff]
    %v171 = vld [vmem:[%s1 + $0x30] sm:$0xff]
    %v172 = vld [vmem:[%s1 + $0x38] sm:$0xff]
    %v173 = vld [vmem:[%s1 + $0x40] sm:$0xff]
    %v174 = vld [vmem:[%s1 + $0x48] sm:$0xff]
    %v175 = vld [vmem:[%s1 + $0x50] sm:$0xff]
    %v176 = vld [vmem:[%s1 + $0x58] sm:$0xff]
    %v177 = vld [vmem:[%s2] sm:$0x1]
    %v179 = vperm.slane %v177, 0
    %vm181 = vcmask 785408
    %v183 = vsel %vm181, %v157, 0
    %v186 = vsel %vm181, %v158, 0
    %v189 = vsel %vm181, %v159, 0
    %v192 = vsel %vm181, %v160, 0
    %v195 = vsel %vm181, %v161, 0
    %v198 = vsel %vm181, %v162, 0
    %v201 = vsel %vm181, %v163, 0
    %v204 = vsel %vm181, %v164, 0
    %206 = vmatpush.msra.mxu0 0.0
    %207 = vmatpush.msra.mxu0 0.0
    %208 = vmatpush.msra.mxu0 0.0
    %209 = vmatpush.msra.mxu0 0.0
    %210 = vmatpush.msra.mxu0 %v176
    %211 = vmatpush.msra.mxu0 %v175
    %212 = vmatpush.msra.mxu0 %v174
    %213 = vmatpush.msra.mxu0 %v173
    %214 = vmatpush.msra.mxu0 %v172
    %215 = vmatpush.msra.mxu0 %v171
    %216 = vmatpush.msra.mxu0 %v170
    %217 = vmatpush.msra.mxu0 %v169
    %218 = vmatpush.msra.mxu0 %v168
    %219 = vmatpush.msra.mxu0 %v167
    %220 = vmatpush.msra.mxu0 %v166
    %221 = vmatpush.msra.mxu0 %v165
    %222 = vmatmul.f32.gmra.mxu0 %v183
    %v223 = vpop.f32.mrf.mxu0
    %v224 = vadd.f32 %v179, %v223
    %225 = vmatmul.f32.gmra.mxu0 %v186
    %v226 = vpop.f32.mrf.mxu0
    %v227 = vadd.f32 %v179, %v226
    %228 = vmatmul.f32.gmra.mxu0 %v189
    %v229 = vpop.f32.mrf.mxu0
    %v230 = vadd.f32 %v179, %v229
    %231 = vmatmul.f32.gmra.mxu0 %v192
    %v232 = vpop.f32.mrf.mxu0
    %v233 = vadd.f32 %v179, %v232
    %234 = vmatmul.f32.gmra.mxu0 %v195
    %v235 = vpop.f32.mrf.mxu0
    %v236 = vadd.f32 %v179, %v235
    %237 = vmatmul.f32.gmra.mxu0 %v198
    %v238 = vpop.f32.mrf.mxu0
    %v239 = vadd.f32 %v179, %v238
    %240 = vmatmul.f32.gmra.mxu0 %v201
    %v241 = vpop.f32.mrf.mxu0
    %v242 = vadd.f32 %v179, %v241
    %243 = vmatmul.f32.gmra.mxu0 %v204
    %v244 = vpop.f32.mrf.mxu0
    %v245 = vadd.f32 %v179, %v244
    %246 = vdwg.mxu0
    %v247 = vsel %vm48, %v224, 0.0
    %v248 = vsel %vm48, %v227, 0.0
    %v249 = vadd.f32 %v247, %v248
    %v250 = vsel %vm48, %v230, 0.0
    %v251 = vadd.f32 %v249, %v250
    %v252 = vsel %vm48, %v233, 0.0
    %v253 = vadd.f32 %v251, %v252
    %v254 = vsel %vm48, %v236, 0.0
    %v255 = vadd.f32 %v253, %v254
    %v256 = vsel %vm48, %v239, 0.0
    %v257 = vadd.f32 %v255, %v256
    %v258 = vsel %vm48, %v242, 0.0
    %v259 = vadd.f32 %v257, %v258
    %v260 = vsel %vm48, %v245, 0.0
    %v261 = vadd.f32 %v259, %v260
    %v262 = vrot.slane %v261, 4
    %v263 = vadd.f32 %v261, %v262
    %v264 = vrot.slane %v263, 2
    %v265 = vadd.f32 %v263, %v264
    %v266 = vrot.slane %v265, 1
    %v267 = vadd.f32 %v265, %v266
    %v268 = vmul.f32 %v267, 0.015625
    %v269 = vsub.f32 %v224, %v268
    %v270 = vsub.f32 %v227, %v268
    %v271 = vsub.f32 %v230, %v268
    %v272 = vsub.f32 %v233, %v268
    %v273 = vsub.f32 %v236, %v268
    %v274 = vsub.f32 %v239, %v268
    %v275 = vsub.f32 %v242, %v268
    %v276 = vsub.f32 %v245, %v268
    %v277 = vmul.f32 %v269, %v269
    %v278 = vmul.f32 %v270, %v270
    %v279 = vmul.f32 %v271, %v271
    %v280 = vmul.f32 %v272, %v272
    %v281 = vmul.f32 %v273, %v273
    %v282 = vmul.f32 %v274, %v274
    %v283 = vmul.f32 %v275, %v275
    %v284 = vmul.f32 %v276, %v276
    %v285 = vsel %vm48, %v277, 0.0
    %v286 = vsel %vm48, %v278, 0.0
    %v287 = vadd.f32 %v285, %v286
    %v288 = vsel %vm48, %v279, 0.0
    %v289 = vadd.f32 %v287, %v288
    %v290 = vsel %vm48, %v280, 0.0
    %v291 = vadd.f32 %v289, %v290
    %v292 = vsel %vm48, %v281, 0.0
    %v293 = vadd.f32 %v291, %v292
    %v294 = vsel %vm48, %v282, 0.0
    %v295 = vadd.f32 %v293, %v294
    %v296 = vsel %vm48, %v283, 0.0
    %v297 = vadd.f32 %v295, %v296
    %v298 = vsel %vm48, %v284, 0.0
    %v299 = vadd.f32 %v297, %v298
    %v300 = vrot.slane %v299, 4
    %v301 = vadd.f32 %v299, %v300
    %v302 = vrot.slane %v301, 2
    %v303 = vadd.f32 %v301, %v302
    %v304 = vrot.slane %v303, 1
    %v305 = vadd.f32 %v303, %v304
    %v306 = vmul.f32 %v305, 0.015625
    %v307 = vadd.f32 %v306, 1e-05
    %v308 = vrsqrt.pop %v307
    %v309 = vmul.f32 %v308, %v307
    %v310 = vmul.f32 %v309, %v308
    %v311 = vmul.f32 0.5, %v310
    %v312 = vsub.f32 1.5, %v311
    %v313 = vmul.f32 %v308, %v312
    %vm314 = vweird.f32 %v307
    %vm315 = vweird.f32 %v308
    %vm316 = vmor %vm314, %vm315
    %v317 = vsel %vm316, %v308, %v313
    %v318 = vmul.f32 %v269, %v317
    %v319 = vmul.f32 %v270, %v317
    %v320 = vmul.f32 %v271, %v317
    %v321 = vmul.f32 %v272, %v317
    %v322 = vmul.f32 %v273, %v317
    %v323 = vmul.f32 %v274, %v317
    %v324 = vmul.f32 %v275, %v317
    %v325 = vmul.f32 %v276, %v317
    %v326 = vld [vmem:[%s3] sm:$0x1]
    %v328 = vperm.slane %v326, 0
    %v330 = vmul.f32 %v318, %v328
    %v331 = vmul.f32 %v319, %v328
    %v332 = vmul.f32 %v320, %v328
    %v333 = vmul.f32 %v321, %v328
    %v334 = vmul.f32 %v322, %v328
    %v335 = vmul.f32 %v323, %v328
    %v336 = vmul.f32 %v324, %v328
    %v337 = vmul.f32 %v325, %v328
    %v338 = vld [vmem:[%s4] sm:$0x1]
    %v340 = vperm.slane %v338, 0
    %v342 = vadd.f32 %v330, %v340
    %v343 = vadd.f32 %v331, %v340
    %v344 = vadd.f32 %v332, %v340
    %v345 = vadd.f32 %v333, %v340
    %v346 = vadd.f32 %v334, %v340
    %v347 = vadd.f32 %v335, %v340
    %v348 = vadd.f32 %v336, %v340
    %v349 = vadd.f32 %v337, %v340
    %v350 = vmax.f32 %v342, 0.0
    %v351 = vmax.f32 %v343, 0.0
    %v352 = vmax.f32 %v344, 0.0
    %v353 = vmax.f32 %v345, 0.0
    %v354 = vmax.f32 %v346, 0.0
    %v355 = vmax.f32 %v347, 0.0
    %v356 = vmax.f32 %v348, 0.0
    %v357 = vmax.f32 %v349, 0.0
    %v358 = vld [vmem:[%s5] sm:$0xff]
    %v359 = vld [vmem:[%s5 + $0x8] sm:$0xff]
    %v360 = vld [vmem:[%s5 + $0x10] sm:$0xff]
    %v361 = vld [vmem:[%s5 + $0x18] sm:$0xff]
    %v362 = vld [vmem:[%s7] sm:$0x1]
    %v364 = vperm.slane %v362, 0
    %v367 = vsel %vm48, %v350, 0
    %v370 = vsel %vm48, %v351, 0
    %v373 = vsel %vm48, %v352, 0
    %v376 = vsel %vm48, %v353, 0
    %v379 = vsel %vm48, %v354, 0
    %v382 = vsel %vm48, %v355, 0
    %v385 = vsel %vm48, %v356, 0
    %v388 = vsel %vm48, %v357, 0
    %390 = vmatpush.msra.mxu0 0.0
    %391 = vmatpush.msra.mxu0 0.0
    %392 = vmatpush.msra.mxu0 0.0
    %393 = vmatpush.msra.mxu0 0.0
    %394 = vmatpush.msra.mxu0 0.0
    %395 = vmatpush.msra.mxu0 0.0
    %396 = vmatpush.msra.mxu0 0.0
    %397 = vmatpush.msra.mxu0 0.0
    %398 = vmatpush.msra.mxu0 0.0
    %399 = vmatpush.msra.mxu0 0.0
    %400 = vmatpush.msra.mxu0 0.0
    %401 = vmatpush.msra.mxu0 0.0
    %402 = vmatpush.msra.mxu0 %v361
    %403 = vmatpush.msra.mxu0 %v360
    %404 = vmatpush.msra.mxu0 %v359
    %405 = vmatpush.msra.mxu0 %v358
    %406 = vmatmul.f32.gmra.mxu0 %v367
    %v407 = vpop.f32.mrf.mxu0
    %v408 = vadd.f32 %v364, %v407
    %409 = vmatmul.f32.gmra.mxu0 %v370
    %v410 = vpop.f32.mrf.mxu0
    %v411 = vadd.f32 %v364, %v410
    %412 = vmatmul.f32.gmra.mxu0 %v373
    %v413 = vpop.f32.mrf.mxu0
    %v414 = vadd.f32 %v364, %v413
    %415 = vmatmul.f32.gmra.mxu0 %v376
    %v416 = vpop.f32.mrf.mxu0
    %v417 = vadd.f32 %v364, %v416
    %418 = vmatmul.f32.gmra.mxu0 %v379
    %v419 = vpop.f32.mrf.mxu0
    %v420 = vadd.f32 %v364, %v419
    %421 = vmatmul.f32.gmra.mxu0 %v382
    %v422 = vpop.f32.mrf.mxu0
    %v423 = vadd.f32 %v364, %v422
    %424 = vmatmul.f32.gmra.mxu0 %v385
    %v425 = vpop.f32.mrf.mxu0
    %v426 = vadd.f32 %v364, %v425
    %427 = vmatmul.f32.gmra.mxu0 %v388
    %v428 = vpop.f32.mrf.mxu0
    %v429 = vadd.f32 %v364, %v428
    %430 = vdwg.mxu0
    %v431 = vld [vmem:[%s6] sm:$0xff]
    %v432 = vld [vmem:[%s6 + $0x8] sm:$0xff]
    %v433 = vld [vmem:[%s6 + $0x10] sm:$0xff]
    %v434 = vld [vmem:[%s6 + $0x18] sm:$0xff]
    %v435 = vld [vmem:[%s8] sm:$0xff]
    %v436 = vld [vmem:[%s8 + $0x8] sm:$0xff]
    %v437 = vld [vmem:[%s8 + $0x10] sm:$0xff]
    %v438 = vld [vmem:[%s8 + $0x18] sm:$0xff]
    %v439 = vld [vmem:[%s9] sm:$0xff]
    %v440 = vld [vmem:[%s9 + $0x8] sm:$0xff]
    %v441 = vld [vmem:[%s9 + $0x10] sm:$0xff]
    %v442 = vld [vmem:[%s9 + $0x18] sm:$0xff]
    %v443 = vld [vmem:[%s10] sm:$0x1]
    %v444 = vld [vmem:[%s13] sm:$0xff]
    %v445 = vlaneseq
    %v446 = vand.u32 %v445, 127
    %vm447 = vcmp.ge.s32.totalorder %v446, 64
    %vm448 = vcmp.lt.s32.totalorder %v446, 96
    %vm449 = vmand %vm447, %vm448
    %vm450 = vcmp.gt.s32.totalorder %v444, 0
    %v452 = vsel %vm48, 0.0, 0
    %454 = vmatpush.msra.mxu0 0.0
    %455 = vmatpush.msra.mxu0 0.0
    %456 = vmatpush.msra.mxu0 0.0
    %457 = vmatpush.msra.mxu0 0.0
    %458 = vmatpush.msra.mxu0 0.0
    %459 = vmatpush.msra.mxu0 0.0
    %460 = vmatpush.msra.mxu0 0.0
    %461 = vmatpush.msra.mxu0 0.0
    %462 = vmatpush.msra.mxu0 0.0
    %463 = vmatpush.msra.mxu0 0.0
    %464 = vmatpush.msra.mxu0 0.0
    %465 = vmatpush.msra.mxu0 0.0
    %466 = vmatpush.msra.mxu0 %v434
    %467 = vmatpush.msra.mxu0 %v433
    %468 = vmatpush.msra.mxu0 %v432
    %469 = vmatpush.msra.mxu0 %v431
    %470 = vmatmul.f32.gmra.mxu0 %v452
    %v471 = vpop.f32.mrf.mxu0
    %v472 = vadd.f32 %v408, %v471
    %473 = vdwg.mxu0
    %v474 = vtanh.pop %v472
    %v475 = vxor.u32 %v472, 2147483648
    %v476 = vmul.f32 %v475, 1.442695
    %v477 = vpow.pop %v476
    %v478 = vadd.f32 %v477, 1.0
    %v479 = vrcp.pop %v478
    %v480 = vmul.f32 %v478, %v479
    %v481 = vsub.f32 1.0, %v480
    %v482 = vmul.f32 %v479, %v481
    %v483 = vadd.f32 %v479, %v482
    %vm484 = vweird.f32 %v478
    %vm485 = vweird.f32 %v479
    %vm486 = vmor %vm484, %vm485
    %v487 = vsel %vm486, %v479, %v483
    %v488 = vand.u32 2147483647, %v478
    %vm489 = vcmp.eq.f32.partialorder %v488, 8.507059e+37
    %v490 = vand.u32 %v478, 2147483648
    %v491 = vor.u32 1.1754944e-38, %v490
    %v492 = vsel %vm489, %v491, %v487
    %v493 = vmul.f32 1.0, %v492
    %v494 = vsel %vm449, %v474, %v493
    %v495 = vmul.f32 %v494, 0.0
    %497 = vrot.lane.b32.xlu0 %v494, 64
    %v498 = vpop.permute.xlu0 %497
    %v500 = vmul.f32 %v494, %v498
    %502 = vrot.lane.b32.xlu0 %v500, 32
    %v503 = vpop.permute.xlu0 %502
    %v505 = vadd.f32 %v495, %v503
    %v506 = vtanh.pop %v505
    %508 = vrot.lane.b32.xlu0 %v506, 64
    %v509 = vpop.permute.xlu0 %508
    %v511 = vmul.f32 %v494, %v509
    %v512 = vsel %vm450, 1, 0
    %513 = vset.pattern.permute.xlu0 0
    %514 = vperm.xlu0 %513, %v512
    %v515 = vpop.permute.xlu0 %514
    %vm516 = vcmp.eq.s32.totalorder %v515, 1
    %v517 = vsel %vm516, %v511, 0.0
    %v518 = vsel %vm516, %v505, 0.0
    %519 = vmatpush.msra.mxu0 0.0
    %520 = vmatpush.msra.mxu0 0.0
    %521 = vmatpush.msra.mxu0 0.0
    %522 = vmatpush.msra.mxu0 0.0
    %523 = vmatpush.msra.mxu0 0.0
    %524 = vmatpush.msra.mxu0 0.0
    %525 = vmatpush.msra.mxu0 0.0
    %526 = vmatpush.msra.mxu0 0.0
    %527 = vmatpush.msra.mxu0 0.0
    %528 = vmatpush.msra.mxu0 0.0
    %529 = vmatpush.msra.mxu0 0.0
    %530 = vmatpush.msra.mxu0 0.0
    %531 = vmatpush.msra.mxu0 %v442
    %532 = vmatpush.msra.mxu0 %v441
    %533 = vmatpush.msra.mxu0 %v440
    %534 = vmatpush.msra.mxu0 %v439
    %535 = vmatmul.f32.gmra.mxu0 %v452
    %v536 = vpop.f32.mrf.mxu0
    %v537 = vadd.f32 0.0, %v536
    %538 = vdwg.mxu0
    %540 = vrot.lane.b32.xlu0 %v517, 32
    %v541 = vpop.permute.xlu0 %540
    %v542 = vsel %vm48, %v541, 0
    %544 = vmatpush.msra.mxu0 0.0
    %545 = vmatpush.msra.mxu0 0.0
    %546 = vmatpush.msra.mxu0 0.0
    %547 = vmatpush.msra.mxu0 0.0
    %548 = vmatpush.msra.mxu0 0.0
    %549 = vmatpush.msra.mxu0 0.0
    %550 = vmatpush.msra.mxu0 0.0
    %551 = vmatpush.msra.mxu0 0.0
    %552 = vmatpush.msra.mxu0 0.0
    %553 = vmatpush.msra.mxu0 0.0
    %554 = vmatpush.msra.mxu0 0.0
    %555 = vmatpush.msra.mxu0 0.0
    %556 = vmatpush.msra.mxu0 %v438
    %557 = vmatpush.msra.mxu0 %v437
    %558 = vmatpush.msra.mxu0 %v436
    %559 = vmatpush.msra.mxu0 %v435
    %560 = vmatmul.f32.gmra.mxu0 %v542
    %v561 = vpop.f32.mrf.mxu0
    %v562 = vadd.f32 %v537, %v561
    %563 = vdwg.mxu0
    %v565 = vperm.slane %v443, 0
    %v567 = vadd.f32 %v562, %v565
    %v568 = vtanh.pop %v567
    %v569 = vxor.u32 %v567, 2147483648
    %v570 = vmul.f32 %v569, 1.442695
    %v571 = vpow.pop %v570
    %v572 = vadd.f32 %v571, 1.0
    %v573 = vrcp.pop %v572
    %v574 = vmul.f32 %v572, %v573
    %v575 = vsub.f32 1.0, %v574
    %v576 = vmul.f32 %v573, %v575
    %v577 = vadd.f32 %v573, %v576
    %vm578 = vweird.f32 %v572
    %vm579 = vweird.f32 %v573
    %vm580 = vmor %vm578, %vm579
    %v581 = vsel %vm580, %v573, %v577
    %v582 = vand.u32 2147483647, %v572
    %vm583 = vcmp.eq.f32.partialorder %v582, 8.507059e+37
    %v584 = vand.u32 %v572, 2147483648
    %v585 = vor.u32 1.1754944e-38, %v584
    %v586 = vsel %vm583, %v585, %v581
    %v587 = vmul.f32 1.0, %v586
    %v588 = vsel %vm449, %v568, %v587
    %v589 = vmul.f32 %v588, 0.0
    %591 = vrot.lane.b32.xlu0 %v588, 64
    %v592 = vpop.permute.xlu0 %591
    %v594 = vmul.f32 %v588, %v592
    %596 = vrot.lane.b32.xlu0 %v594, 32
    %v597 = vpop.permute.xlu0 %596
    %v599 = vadd.f32 %v589, %v597
    %v600 = vtanh.pop %v599
    %602 = vrot.lane.b32.xlu0 %v600, 64
    %v603 = vpop.permute.xlu0 %602
    %v605 = vmul.f32 %v588, %v603
    %v606 = vsel %vm516, %v605, 0.0
    %v607 = vsel %vm516, %v599, 0.0
    %vm608 = vcmp.gt.s32.totalorder %v444, 1
    %609 = vmatpush.msra.mxu0 0.0
    %610 = vmatpush.msra.mxu0 0.0
    %611 = vmatpush.msra.mxu0 0.0
    %612 = vmatpush.msra.mxu0 0.0
    %613 = vmatpush.msra.mxu0 0.0
    %614 = vmatpush.msra.mxu0 0.0
    %615 = vmatpush.msra.mxu0 0.0
    %616 = vmatpush.msra.mxu0 0.0
    %617 = vmatpush.msra.mxu0 0.0
    %618 = vmatpush.msra.mxu0 0.0
    %619 = vmatpush.msra.mxu0 0.0
    %620 = vmatpush.msra.mxu0 0.0
    %621 = vmatpush.msra.mxu0 %v434
    %622 = vmatpush.msra.mxu0 %v433
    %623 = vmatpush.msra.mxu0 %v432
    %624 = vmatpush.msra.mxu0 %v431
    %625 = vmatmul.f32.gmra.mxu0 %v542
    %v626 = vpop.f32.mrf.mxu0
    %v627 = vadd.f32 %v411, %v626
    %628 = vdwg.mxu0
    %v629 = vtanh.pop %v627
    %v630 = vxor.u32 %v627, 2147483648
    %v631 = vmul.f32 %v630, 1.442695
    %v632 = vpow.pop %v631
    %v633 = vadd.f32 %v632, 1.0
    %v634 = vrcp.pop %v633
    %v635 = vmul.f32 %v633, %v634
    %v636 = vsub.f32 1.0, %v635
    %v637 = vmul.f32 %v634, %v636
    %v638 = vadd.f32 %v634, %v637
    %vm639 = vweird.f32 %v633
    %vm640 = vweird.f32 %v634
    %vm641 = vmor %vm639, %vm640
    %v642 = vsel %vm641, %v634, %v638
    %v643 = vand.u32 2147483647, %v633
    %vm644 = vcmp.eq.f32.partialorder %v643, 8.507059e+37
    %v645 = vand.u32 %v633, 2147483648
    %v646 = vor.u32 1.1754944e-38, %v645
    %v647 = vsel %vm644, %v646, %v642
    %v648 = vmul.f32 1.0, %v647
    %v649 = vsel %vm449, %v629, %v648
    %v650 = vmul.f32 %v649, %v518
    %652 = vrot.lane.b32.xlu0 %v649, 64
    %v653 = vpop.permute.xlu0 %652
    %v655 = vmul.f32 %v649, %v653
    %657 = vrot.lane.b32.xlu0 %v655, 32
    %v658 = vpop.permute.xlu0 %657
    %v660 = vadd.f32 %v650, %v658
    %v661 = vtanh.pop %v660
    %663 = vrot.lane.b32.xlu0 %v661, 64
    %v664 = vpop.permute.xlu0 %663
    %v666 = vmul.f32 %v649, %v664
    %v667 = vsel %vm608, 1, 0
    %668 = vset.pattern.permute.xlu0 0
    %669 = vperm.xlu0 %668, %v667
    %v670 = vpop.permute.xlu0 %669
    %vm671 = vcmp.eq.s32.totalorder %v670, 1
    %v672 = vsel %vm671, %v666, %v517
    %v673 = vsel %vm671, %v660, %v518
    %675 = vrot.lane.b32.xlu0 %v606, 32
    %v676 = vpop.permute.xlu0 %675
    %v677 = vsel %vm48, %v676, 0
    %679 = vmatpush.msra.mxu0 0.0
    %680 = vmatpush.msra.mxu0 0.0
    %681 = vmatpush.msra.mxu0 0.0
    %682 = vmatpush.msra.mxu0 0.0
    %683 = vmatpush.msra.mxu0 0.0
    %684 = vmatpush.msra.mxu0 0.0
    %685 = vmatpush.msra.mxu0 0.0
    %686 = vmatpush.msra.mxu0 0.0
    %687 = vmatpush.msra.mxu0 0.0
    %688 = vmatpush.msra.mxu0 0.0
    %689 = vmatpush.msra.mxu0 0.0
    %690 = vmatpush.msra.mxu0 0.0
    %691 = vmatpush.msra.mxu0 %v442
    %692 = vmatpush.msra.mxu0 %v441
    %693 = vmatpush.msra.mxu0 %v440
    %694 = vmatpush.msra.mxu0 %v439
    %695 = vmatmul.f32.gmra.mxu0 %v677
    %v696 = vpop.f32.mrf.mxu0
    %v697 = vadd.f32 0.0, %v696
    %698 = vdwg.mxu0
    %700 = vrot.lane.b32.xlu0 %v672, 32
    %v701 = vpop.permute.xlu0 %700
    %v702 = vsel %vm48, %v701, 0
    %704 = vmatpush.msra.mxu0 0.0
    %705 = vmatpush.msra.mxu0 0.0
    %706 = vmatpush.msra.mxu0 0.0
    %707 = vmatpush.msra.mxu0 0.0
    %708 = vmatpush.msra.mxu0 0.0
    %709 = vmatpush.msra.mxu0 0.0
    %710 = vmatpush.msra.mxu0 0.0
    %711 = vmatpush.msra.mxu0 0.0
    %712 = vmatpush.msra.mxu0 0.0
    %713 = vmatpush.msra.mxu0 0.0
    %714 = vmatpush.msra.mxu0 0.0
    %715 = vmatpush.msra.mxu0 0.0
    %716 = vmatpush.msra.mxu0 %v438
    %717 = vmatpush.msra.mxu0 %v437
    %718 = vmatpush.msra.mxu0 %v436
    %719 = vmatpush.msra.mxu0 %v435
    %720 = vmatmul.f32.gmra.mxu0 %v702
    %v721 = vpop.f32.mrf.mxu0
    %v722 = vadd.f32 %v697, %v721
    %723 = vdwg.mxu0
    %v724 = vadd.f32 %v722, %v565
    %v725 = vtanh.pop %v724
    %v726 = vxor.u32 %v724, 2147483648
    %v727 = vmul.f32 %v726, 1.442695
    %v728 = vpow.pop %v727
    %v729 = vadd.f32 %v728, 1.0
    %v730 = vrcp.pop %v729
    %v731 = vmul.f32 %v729, %v730
    %v732 = vsub.f32 1.0, %v731
    %v733 = vmul.f32 %v730, %v732
    %v734 = vadd.f32 %v730, %v733
    %vm735 = vweird.f32 %v729
    %vm736 = vweird.f32 %v730
    %vm737 = vmor %vm735, %vm736
    %v738 = vsel %vm737, %v730, %v734
    %v739 = vand.u32 2147483647, %v729
    %vm740 = vcmp.eq.f32.partialorder %v739, 8.507059e+37
    %v741 = vand.u32 %v729, 2147483648
    %v742 = vor.u32 1.1754944e-38, %v741
    %v743 = vsel %vm740, %v742, %v738
    %v744 = vmul.f32 1.0, %v743
    %v745 = vsel %vm449, %v725, %v744
    %v746 = vmul.f32 %v745, %v607
    %748 = vrot.lane.b32.xlu0 %v745, 64
    %v749 = vpop.permute.xlu0 %748
    %v751 = vmul.f32 %v745, %v749
    %753 = vrot.lane.b32.xlu0 %v751, 32
    %v754 = vpop.permute.xlu0 %753
    %v756 = vadd.f32 %v746, %v754
    %v757 = vtanh.pop %v756
    %759 = vrot.lane.b32.xlu0 %v757, 64
    %v760 = vpop.permute.xlu0 %759
    %v762 = vmul.f32 %v745, %v760
    %v763 = vsel %vm671, %v762, %v606
    %v764 = vsel %vm671, %v756, %v607
    %vm765 = vcmp.gt.s32.totalorder %v444, 2
    %766 = vmatpush.msra.mxu0 0.0
    %767 = vmatpush.msra.mxu0 0.0
    %768 = vmatpush.msra.mxu0 0.0
    %769 = vmatpush.msra.mxu0 0.0
    %770 = vmatpush.msra.mxu0 0.0
    %771 = vmatpush.msra.mxu0 0.0
    %772 = vmatpush.msra.mxu0 0.0
    %773 = vmatpush.msra.mxu0 0.0
    %774 = vmatpush.msra.mxu0 0.0
    %775 = vmatpush.msra.mxu0 0.0
    %776 = vmatpush.msra.mxu0 0.0
    %777 = vmatpush.msra.mxu0 0.0
    %778 = vmatpush.msra.mxu0 %v434
    %779 = vmatpush.msra.mxu0 %v433
    %780 = vmatpush.msra.mxu0 %v432
    %781 = vmatpush.msra.mxu0 %v431
    %782 = vmatmul.f32.gmra.mxu0 %v702
    %v783 = vpop.f32.mrf.mxu0
    %v784 = vadd.f32 %v414, %v783
    %785 = vdwg.mxu0
    %v786 = vtanh.pop %v784
    %v787 = vxor.u32 %v784, 2147483648
    %v788 = vmul.f32 %v787, 1.442695
    %v789 = vpow.pop %v788
    %v790 = vadd.f32 %v789, 1.0
    %v791 = vrcp.pop %v790
    %v792 = vmul.f32 %v790, %v791
    %v793 = vsub.f32 1.0, %v792
    %v794 = vmul.f32 %v791, %v793
    %v795 = vadd.f32 %v791, %v794
    %vm796 = vweird.f32 %v790
    %vm797 = vweird.f32 %v791
    %vm798 = vmor %vm796, %vm797
    %v799 = vsel %vm798, %v791, %v795
    %v800 = vand.u32 2147483647, %v790
    %vm801 = vcmp.eq.f32.partialorder %v800, 8.507059e+37
    %v802 = vand.u32 %v790, 2147483648
    %v803 = vor.u32 1.1754944e-38, %v802
    %v804 = vsel %vm801, %v803, %v799
    %v805 = vmul.f32 1.0, %v804
    %v806 = vsel %vm449, %v786, %v805
    %v807 = vmul.f32 %v806, %v673
    %809 = vrot.lane.b32.xlu0 %v806, 64
    %v810 = vpop.permute.xlu0 %809
    %v812 = vmul.f32 %v806, %v810
    %814 = vrot.lane.b32.xlu0 %v812, 32
    %v815 = vpop.permute.xlu0 %814
    %v817 = vadd.f32 %v807, %v815
    %v818 = vtanh.pop %v817
    %820 = vrot.lane.b32.xlu0 %v818, 64
    %v821 = vpop.permute.xlu0 %820
    %v823 = vmul.f32 %v806, %v821
    %v824 = vsel %vm765, 1, 0
    %825 = vset.pattern.permute.xlu0 0
    %826 = vperm.xlu0 %825, %v824
    %v827 = vpop.permute.xlu0 %826
    %vm828 = vcmp.eq.s32.totalorder %v827, 1
    %v829 = vsel %vm828, %v823, %v672
    %v830 = vsel %vm828, %v817, %v673
    %832 = vrot.lane.b32.xlu0 %v763, 32
    %v833 = vpop.permute.xlu0 %832
    %v834 = vsel %vm48, %v833, 0
    %836 = vmatpush.msra.mxu0 0.0
    %837 = vmatpush.msra.mxu0 0.0
    %838 = vmatpush.msra.mxu0 0.0
    %839 = vmatpush.msra.mxu0 0.0
    %840 = vmatpush.msra.mxu0 0.0
    %841 = vmatpush.msra.mxu0 0.0
    %842 = vmatpush.msra.mxu0 0.0
    %843 = vmatpush.msra.mxu0 0.0
    %844 = vmatpush.msra.mxu0 0.0
    %845 = vmatpush.msra.mxu0 0.0
    %846 = vmatpush.msra.mxu0 0.0
    %847 = vmatpush.msra.mxu0 0.0
    %848 = vmatpush.msra.mxu0 %v442
    %849 = vmatpush.msra.mxu0 %v441
    %850 = vmatpush.msra.mxu0 %v440
    %851 = vmatpush.msra.mxu0 %v439
    %852 = vmatmul.f32.gmra.mxu0 %v834
    %v853 = vpop.f32.mrf.mxu0
    %v854 = vadd.f32 0.0, %v853
    %855 = vdwg.mxu0
    %857 = vrot.lane.b32.xlu0 %v829, 32
    %v858 = vpop.permute.xlu0 %857
    %v859 = vsel %vm48, %v858, 0
    %861 = vmatpush.msra.mxu0 0.0
    %862 = vmatpush.msra.mxu0 0.0
    %863 = vmatpush.msra.mxu0 0.0
    %864 = vmatpush.msra.mxu0 0.0
    %865 = vmatpush.msra.mxu0 0.0
    %866 = vmatpush.msra.mxu0 0.0
    %867 = vmatpush.msra.mxu0 0.0
    %868 = vmatpush.msra.mxu0 0.0
    %869 = vmatpush.msra.mxu0 0.0
    %870 = vmatpush.msra.mxu0 0.0
    %871 = vmatpush.msra.mxu0 0.0
    %872 = vmatpush.msra.mxu0 0.0
    %873 = vmatpush.msra.mxu0 %v438
    %874 = vmatpush.msra.mxu0 %v437
    %875 = vmatpush.msra.mxu0 %v436
    %876 = vmatpush.msra.mxu0 %v435
    %877 = vmatmul.f32.gmra.mxu0 %v859
    %v878 = vpop.f32.mrf.mxu0
    %v879 = vadd.f32 %v854, %v878
    %880 = vdwg.mxu0
    %v881 = vadd.f32 %v879, %v565
    %v882 = vtanh.pop %v881
    %v883 = vxor.u32 %v881, 2147483648
    %v884 = vmul.f32 %v883, 1.442695
    %v885 = vpow.pop %v884
    %v886 = vadd.f32 %v885, 1.0
    %v887 = vrcp.pop %v886
    %v888 = vmul.f32 %v886, %v887
    %v889 = vsub.f32 1.0, %v888
    %v890 = vmul.f32 %v887, %v889
    %v891 = vadd.f32 %v887, %v890
    %vm892 = vweird.f32 %v886
    %vm893 = vweird.f32 %v887
    %vm894 = vmor %vm892, %vm893
    %v895 = vsel %vm894, %v887, %v891
    %v896 = vand.u32 2147483647, %v886
    %vm897 = vcmp.eq.f32.partialorder %v896, 8.507059e+37
    %v898 = vand.u32 %v886, 2147483648
    %v899 = vor.u32 1.1754944e-38, %v898
    %v900 = vsel %vm897, %v899, %v895
    %v901 = vmul.f32 1.0, %v900
    %v902 = vsel %vm449, %v882, %v901
    %v903 = vmul.f32 %v902, %v764
    %905 = vrot.lane.b32.xlu0 %v902, 64
    %v906 = vpop.permute.xlu0 %905
    %v908 = vmul.f32 %v902, %v906
    %910 = vrot.lane.b32.xlu0 %v908, 32
    %v911 = vpop.permute.xlu0 %910
    %v913 = vadd.f32 %v903, %v911
    %v914 = vtanh.pop %v913
    %916 = vrot.lane.b32.xlu0 %v914, 64
    %v917 = vpop.permute.xlu0 %916
    %v919 = vmul.f32 %v902, %v917
    %v920 = vsel %vm828, %v919, %v763
    %v921 = vsel %vm828, %v913, %v764
    %vm922 = vcmp.gt.s32.totalorder %v444, 3
    %923 = vmatpush.msra.mxu0 0.0
    %924 = vmatpush.msra.mxu0 0.0
    %925 = vmatpush.msra.mxu0 0.0
    %926 = vmatpush.msra.mxu0 0.0
    %927 = vmatpush.msra.mxu0 0.0
    %928 = vmatpush.msra.mxu0 0.0
    %929 = vmatpush.msra.mxu0 0.0
    %930 = vmatpush.msra.mxu0 0.0
    %931 = vmatpush.msra.mxu0 0.0
    %932 = vmatpush.msra.mxu0 0.0
    %933 = vmatpush.msra.mxu0 0.0
    %934 = vmatpush.msra.mxu0 0.0
    %935 = vmatpush.msra.mxu0 %v434
    %936 = vmatpush.msra.mxu0 %v433
    %937 = vmatpush.msra.mxu0 %v432
    %938 = vmatpush.msra.mxu0 %v431
    %939 = vmatmul.f32.gmra.mxu0 %v859
    %v940 = vpop.f32.mrf.mxu0
    %v941 = vadd.f32 %v417, %v940
    %942 = vdwg.mxu0
    %v943 = vtanh.pop %v941
    %v944 = vxor.u32 %v941, 2147483648
    %v945 = vmul.f32 %v944, 1.442695
    %v946 = vpow.pop %v945
    %v947 = vadd.f32 %v946, 1.0
    %v948 = vrcp.pop %v947
    %v949 = vmul.f32 %v947, %v948
    %v950 = vsub.f32 1.0, %v949
    %v951 = vmul.f32 %v948, %v950
    %v952 = vadd.f32 %v948, %v951
    %vm953 = vweird.f32 %v947
    %vm954 = vweird.f32 %v948
    %vm955 = vmor %vm953, %vm954
    %v956 = vsel %vm955, %v948, %v952
    %v957 = vand.u32 2147483647, %v947
    %vm958 = vcmp.eq.f32.partialorder %v957, 8.507059e+37
    %v959 = vand.u32 %v947, 2147483648
    %v960 = vor.u32 1.1754944e-38, %v959
    %v961 = vsel %vm958, %v960, %v956
    %v962 = vmul.f32 1.0, %v961
    %v963 = vsel %vm449, %v943, %v962
    %v964 = vmul.f32 %v963, %v830
    %966 = vrot.lane.b32.xlu0 %v963, 64
    %v967 = vpop.permute.xlu0 %966
    %v969 = vmul.f32 %v963, %v967
    %971 = vrot.lane.b32.xlu0 %v969, 32
    %v972 = vpop.permute.xlu0 %971
    %v974 = vadd.f32 %v964, %v972
    %v975 = vtanh.pop %v974
    %977 = vrot.lane.b32.xlu0 %v975, 64
    %v978 = vpop.permute.xlu0 %977
    %v980 = vmul.f32 %v963, %v978
    %v981 = vsel %vm922, 1, 0
    %982 = vset.pattern.permute.xlu0 0
    %983 = vperm.xlu0 %982, %v981
    %v984 = vpop.permute.xlu0 %983
    %vm985 = vcmp.eq.s32.totalorder %v984, 1
    %v986 = vsel %vm985, %v980, %v829
    %v987 = vsel %vm985, %v974, %v830
    %989 = vrot.lane.b32.xlu0 %v920, 32
    %v990 = vpop.permute.xlu0 %989
    %v991 = vsel %vm48, %v990, 0
    %993 = vmatpush.msra.mxu0 0.0
    %994 = vmatpush.msra.mxu0 0.0
    %995 = vmatpush.msra.mxu0 0.0
    %996 = vmatpush.msra.mxu0 0.0
    %997 = vmatpush.msra.mxu0 0.0
    %998 = vmatpush.msra.mxu0 0.0
    %999 = vmatpush.msra.mxu0 0.0
    %1000 = vmatpush.msra.mxu0 0.0
    %1001 = vmatpush.msra.mxu0 0.0
    %1002 = vmatpush.msra.mxu0 0.0
    %1003 = vmatpush.msra.mxu0 0.0
    %1004 = vmatpush.msra.mxu0 0.0
    %1005 = vmatpush.msra.mxu0 %v442
    %1006 = vmatpush.msra.mxu0 %v441
    %1007 = vmatpush.msra.mxu0 %v440
    %1008 = vmatpush.msra.mxu0 %v439
    %1009 = vmatmul.f32.gmra.mxu0 %v991
    %v1010 = vpop.f32.mrf.mxu0
    %v1011 = vadd.f32 0.0, %v1010
    %1012 = vdwg.mxu0
    %1014 = vrot.lane.b32.xlu0 %v986, 32
    %v1015 = vpop.permute.xlu0 %1014
    %v1016 = vsel %vm48, %v1015, 0
    %1018 = vmatpush.msra.mxu0 0.0
    %1019 = vmatpush.msra.mxu0 0.0
    %1020 = vmatpush.msra.mxu0 0.0
    %1021 = vmatpush.msra.mxu0 0.0
    %1022 = vmatpush.msra.mxu0 0.0
    %1023 = vmatpush.msra.mxu0 0.0
    %1024 = vmatpush.msra.mxu0 0.0
    %1025 = vmatpush.msra.mxu0 0.0
    %1026 = vmatpush.msra.mxu0 0.0
    %1027 = vmatpush.msra.mxu0 0.0
    %1028 = vmatpush.msra.mxu0 0.0
    %1029 = vmatpush.msra.mxu0 0.0
    %1030 = vmatpush.msra.mxu0 %v438
    %1031 = vmatpush.msra.mxu0 %v437
    %1032 = vmatpush.msra.mxu0 %v436
    %1033 = vmatpush.msra.mxu0 %v435
    %1034 = vmatmul.f32.gmra.mxu0 %v1016
    %v1035 = vpop.f32.mrf.mxu0
    %v1036 = vadd.f32 %v1011, %v1035
    %1037 = vdwg.mxu0
    %v1038 = vadd.f32 %v1036, %v565
    %v1039 = vtanh.pop %v1038
    %v1040 = vxor.u32 %v1038, 2147483648
    %v1041 = vmul.f32 %v1040, 1.442695
    %v1042 = vpow.pop %v1041
    %v1043 = vadd.f32 %v1042, 1.0
    %v1044 = vrcp.pop %v1043
    %v1045 = vmul.f32 %v1043, %v1044
    %v1046 = vsub.f32 1.0, %v1045
    %v1047 = vmul.f32 %v1044, %v1046
    %v1048 = vadd.f32 %v1044, %v1047
    %vm1049 = vweird.f32 %v1043
    %vm1050 = vweird.f32 %v1044
    %vm1051 = vmor %vm1049, %vm1050
    %v1052 = vsel %vm1051, %v1044, %v1048
    %v1053 = vand.u32 2147483647, %v1043
    %vm1054 = vcmp.eq.f32.partialorder %v1053, 8.507059e+37
    %v1055 = vand.u32 %v1043, 2147483648
    %v1056 = vor.u32 1.1754944e-38, %v1055
    %v1057 = vsel %vm1054, %v1056, %v1052
    %v1058 = vmul.f32 1.0, %v1057
    %v1059 = vsel %vm449, %v1039, %v1058
    %v1060 = vmul.f32 %v1059, %v921
    %1062 = vrot.lane.b32.xlu0 %v1059, 64
    %v1063 = vpop.permute.xlu0 %1062
    %v1065 = vmul.f32 %v1059, %v1063
    %1067 = vrot.lane.b32.xlu0 %v1065, 32
    %v1068 = vpop.permute.xlu0 %1067
    %v1070 = vadd.f32 %v1060, %v1068
    %v1071 = vtanh.pop %v1070
    %1073 = vrot.lane.b32.xlu0 %v1071, 64
    %v1074 = vpop.permute.xlu0 %1073
    %v1076 = vmul.f32 %v1059, %v1074
    %v1077 = vsel %vm985, %v1076, %v920
    %v1078 = vsel %vm985, %v1070, %v921
    %vm1079 = vcmp.gt.s32.totalorder %v444, 4
    %1080 = vmatpush.msra.mxu0 0.0
    %1081 = vmatpush.msra.mxu0 0.0
    %1082 = vmatpush.msra.mxu0 0.0
    %1083 = vmatpush.msra.mxu0 0.0
    %1084 = vmatpush.msra.mxu0 0.0
    %1085 = vmatpush.msra.mxu0 0.0
    %1086 = vmatpush.msra.mxu0 0.0
    %1087 = vmatpush.msra.mxu0 0.0
    %1088 = vmatpush.msra.mxu0 0.0
    %1089 = vmatpush.msra.mxu0 0.0
    %1090 = vmatpush.msra.mxu0 0.0
    %1091 = vmatpush.msra.mxu0 0.0
    %1092 = vmatpush.msra.mxu0 %v434
    %1093 = vmatpush.msra.mxu0 %v433
    %1094 = vmatpush.msra.mxu0 %v432
    %1095 = vmatpush.msra.mxu0 %v431
    %1096 = vmatmul.f32.gmra.mxu0 %v1016
    %v1097 = vpop.f32.mrf.mxu0
    %v1098 = vadd.f32 %v420, %v1097
    %1099 = vdwg.mxu0
    %v1100 = vtanh.pop %v1098
    %v1101 = vxor.u32 %v1098, 2147483648
    %v1102 = vmul.f32 %v1101, 1.442695
    %v1103 = vpow.pop %v1102
    %v1104 = vadd.f32 %v1103, 1.0
    %v1105 = vrcp.pop %v1104
    %v1106 = vmul.f32 %v1104, %v1105
    %v1107 = vsub.f32 1.0, %v1106
    %v1108 = vmul.f32 %v1105, %v1107
    %v1109 = vadd.f32 %v1105, %v1108
    %vm1110 = vweird.f32 %v1104
    %vm1111 = vweird.f32 %v1105
    %vm1112 = vmor %vm1110, %vm1111
    %v1113 = vsel %vm1112, %v1105, %v1109
    %v1114 = vand.u32 2147483647, %v1104
    %vm1115 = vcmp.eq.f32.partialorder %v1114, 8.507059e+37
    %v1116 = vand.u32 %v1104, 2147483648
    %v1117 = vor.u32 1.1754944e-38, %v1116
    %v1118 = vsel %vm1115, %v1117, %v1113
    %v1119 = vmul.f32 1.0, %v1118
    %v1120 = vsel %vm449, %v1100, %v1119
    %v1121 = vmul.f32 %v1120, %v987
    %1123 = vrot.lane.b32.xlu0 %v1120, 64
    %v1124 = vpop.permute.xlu0 %1123
    %v1126 = vmul.f32 %v1120, %v1124
    %1128 = vrot.lane.b32.xlu0 %v1126, 32
    %v1129 = vpop.permute.xlu0 %1128
    %v1131 = vadd.f32 %v1121, %v1129
    %v1132 = vtanh.pop %v1131
    %1134 = vrot.lane.b32.xlu0 %v1132, 64
    %v1135 = vpop.permute.xlu0 %1134
    %v1137 = vmul.f32 %v1120, %v1135
    %v1138 = vsel %vm1079, 1, 0
    %1139 = vset.pattern.permute.xlu0 0
    %1140 = vperm.xlu0 %1139, %v1138
    %v1141 = vpop.permute.xlu0 %1140
    %vm1142 = vcmp.eq.s32.totalorder %v1141, 1
    %v1143 = vsel %vm1142, %v1137, %v986
    %v1144 = vsel %vm1142, %v1131, %v987
    %1146 = vrot.lane.b32.xlu0 %v1077, 32
    %v1147 = vpop.permute.xlu0 %1146
    %v1148 = vsel %vm48, %v1147, 0
    %1150 = vmatpush.msra.mxu0 0.0
    %1151 = vmatpush.msra.mxu0 0.0
    %1152 = vmatpush.msra.mxu0 0.0
    %1153 = vmatpush.msra.mxu0 0.0
    %1154 = vmatpush.msra.mxu0 0.0
    %1155 = vmatpush.msra.mxu0 0.0
    %1156 = vmatpush.msra.mxu0 0.0
    %1157 = vmatpush.msra.mxu0 0.0
    %1158 = vmatpush.msra.mxu0 0.0
    %1159 = vmatpush.msra.mxu0 0.0
    %1160 = vmatpush.msra.mxu0 0.0
    %1161 = vmatpush.msra.mxu0 0.0
    %1162 = vmatpush.msra.mxu0 %v442
    %1163 = vmatpush.msra.mxu0 %v441
    %1164 = vmatpush.msra.mxu0 %v440
    %1165 = vmatpush.msra.mxu0 %v439
    %1166 = vmatmul.f32.gmra.mxu0 %v1148
    %v1167 = vpop.f32.mrf.mxu0
    %v1168 = vadd.f32 0.0, %v1167
    %1169 = vdwg.mxu0
    %1171 = vrot.lane.b32.xlu0 %v1143, 32
    %v1172 = vpop.permute.xlu0 %1171
    %v1173 = vsel %vm48, %v1172, 0
    %1175 = vmatpush.msra.mxu0 0.0
    %1176 = vmatpush.msra.mxu0 0.0
    %1177 = vmatpush.msra.mxu0 0.0
    %1178 = vmatpush.msra.mxu0 0.0
    %1179 = vmatpush.msra.mxu0 0.0
    %1180 = vmatpush.msra.mxu0 0.0
    %1181 = vmatpush.msra.mxu0 0.0
    %1182 = vmatpush.msra.mxu0 0.0
    %1183 = vmatpush.msra.mxu0 0.0
    %1184 = vmatpush.msra.mxu0 0.0
    %1185 = vmatpush.msra.mxu0 0.0
    %1186 = vmatpush.msra.mxu0 0.0
    %1187 = vmatpush.msra.mxu0 %v438
    %1188 = vmatpush.msra.mxu0 %v437
    %1189 = vmatpush.msra.mxu0 %v436
    %1190 = vmatpush.msra.mxu0 %v435
    %1191 = vmatmul.f32.gmra.mxu0 %v1173
    %v1192 = vpop.f32.mrf.mxu0
    %v1193 = vadd.f32 %v1168, %v1192
    %1194 = vdwg.mxu0
    %v1195 = vadd.f32 %v1193, %v565
    %v1196 = vtanh.pop %v1195
    %v1197 = vxor.u32 %v1195, 2147483648
    %v1198 = vmul.f32 %v1197, 1.442695
    %v1199 = vpow.pop %v1198
    %v1200 = vadd.f32 %v1199, 1.0
    %v1201 = vrcp.pop %v1200
    %v1202 = vmul.f32 %v1200, %v1201
    %v1203 = vsub.f32 1.0, %v1202
    %v1204 = vmul.f32 %v1201, %v1203
    %v1205 = vadd.f32 %v1201, %v1204
    %vm1206 = vweird.f32 %v1200
    %vm1207 = vweird.f32 %v1201
    %vm1208 = vmor %vm1206, %vm1207
    %v1209 = vsel %vm1208, %v1201, %v1205
    %v1210 = vand.u32 2147483647, %v1200
    %vm1211 = vcmp.eq.f32.partialorder %v1210, 8.507059e+37
    %v1212 = vand.u32 %v1200, 2147483648
    %v1213 = vor.u32 1.1754944e-38, %v1212
    %v1214 = vsel %vm1211, %v1213, %v1209
    %v1215 = vmul.f32 1.0, %v1214
    %v1216 = vsel %vm449, %v1196, %v1215
    %v1217 = vmul.f32 %v1216, %v1078
    %1219 = vrot.lane.b32.xlu0 %v1216, 64
    %v1220 = vpop.permute.xlu0 %1219
    %v1222 = vmul.f32 %v1216, %v1220
    %1224 = vrot.lane.b32.xlu0 %v1222, 32
    %v1225 = vpop.permute.xlu0 %1224
    %v1227 = vadd.f32 %v1217, %v1225
    %v1228 = vtanh.pop %v1227
    %1230 = vrot.lane.b32.xlu0 %v1228, 64
    %v1231 = vpop.permute.xlu0 %1230
    %v1233 = vmul.f32 %v1216, %v1231
    %v1234 = vsel %vm1142, %v1233, %v1077
    %v1235 = vsel %vm1142, %v1227, %v1078
    %vm1236 = vcmp.gt.s32.totalorder %v444, 5
    %1237 = vmatpush.msra.mxu0 0.0
    %1238 = vmatpush.msra.mxu0 0.0
    %1239 = vmatpush.msra.mxu0 0.0
    %1240 = vmatpush.msra.mxu0 0.0
    %1241 = vmatpush.msra.mxu0 0.0
    %1242 = vmatpush.msra.mxu0 0.0
    %1243 = vmatpush.msra.mxu0 0.0
    %1244 = vmatpush.msra.mxu0 0.0
    %1245 = vmatpush.msra.mxu0 0.0
    %1246 = vmatpush.msra.mxu0 0.0
    %1247 = vmatpush.msra.mxu0 0.0
    %1248 = vmatpush.msra.mxu0 0.0
    %1249 = vmatpush.msra.mxu0 %v434
    %1250 = vmatpush.msra.mxu0 %v433
    %1251 = vmatpush.msra.mxu0 %v432
    %1252 = vmatpush.msra.mxu0 %v431
    %1253 = vmatmul.f32.gmra.mxu0 %v1173
    %v1254 = vpop.f32.mrf.mxu0
    %v1255 = vadd.f32 %v423, %v1254
    %1256 = vdwg.mxu0
    %v1257 = vtanh.pop %v1255
    %v1258 = vxor.u32 %v1255, 2147483648
    %v1259 = vmul.f32 %v1258, 1.442695
    %v1260 = vpow.pop %v1259
    %v1261 = vadd.f32 %v1260, 1.0
    %v1262 = vrcp.pop %v1261
    %v1263 = vmul.f32 %v1261, %v1262
    %v1264 = vsub.f32 1.0, %v1263
    %v1265 = vmul.f32 %v1262, %v1264
    %v1266 = vadd.f32 %v1262, %v1265
    %vm1267 = vweird.f32 %v1261
    %vm1268 = vweird.f32 %v1262
    %vm1269 = vmor %vm1267, %vm1268
    %v1270 = vsel %vm1269, %v1262, %v1266
    %v1271 = vand.u32 2147483647, %v1261
    %vm1272 = vcmp.eq.f32.partialorder %v1271, 8.507059e+37
    %v1273 = vand.u32 %v1261, 2147483648
    %v1274 = vor.u32 1.1754944e-38, %v1273
    %v1275 = vsel %vm1272, %v1274, %v1270
    %v1276 = vmul.f32 1.0, %v1275
    %v1277 = vsel %vm449, %v1257, %v1276
    %v1278 = vmul.f32 %v1277, %v1144
    %1280 = vrot.lane.b32.xlu0 %v1277, 64
    %v1281 = vpop.permute.xlu0 %1280
    %v1283 = vmul.f32 %v1277, %v1281
    %1285 = vrot.lane.b32.xlu0 %v1283, 32
    %v1286 = vpop.permute.xlu0 %1285
    %v1288 = vadd.f32 %v1278, %v1286
    %v1289 = vtanh.pop %v1288
    %1291 = vrot.lane.b32.xlu0 %v1289, 64
    %v1292 = vpop.permute.xlu0 %1291
    %v1294 = vmul.f32 %v1277, %v1292
    %v1295 = vsel %vm1236, 1, 0
    %1296 = vset.pattern.permute.xlu0 0
    %1297 = vperm.xlu0 %1296, %v1295
    %v1298 = vpop.permute.xlu0 %1297
    %vm1299 = vcmp.eq.s32.totalorder %v1298, 1
    %v1300 = vsel %vm1299, %v1294, %v1143
    %v1301 = vsel %vm1299, %v1288, %v1144
    %1303 = vrot.lane.b32.xlu0 %v1234, 32
    %v1304 = vpop.permute.xlu0 %1303
    %v1305 = vsel %vm48, %v1304, 0
    %1307 = vmatpush.msra.mxu0 0.0
    %1308 = vmatpush.msra.mxu0 0.0
    %1309 = vmatpush.msra.mxu0 0.0
    %1310 = vmatpush.msra.mxu0 0.0
    %1311 = vmatpush.msra.mxu0 0.0
    %1312 = vmatpush.msra.mxu0 0.0
    %1313 = vmatpush.msra.mxu0 0.0
    %1314 = vmatpush.msra.mxu0 0.0
    %1315 = vmatpush.msra.mxu0 0.0
    %1316 = vmatpush.msra.mxu0 0.0
    %1317 = vmatpush.msra.mxu0 0.0
    %1318 = vmatpush.msra.mxu0 0.0
    %1319 = vmatpush.msra.mxu0 %v442
    %1320 = vmatpush.msra.mxu0 %v441
    %1321 = vmatpush.msra.mxu0 %v440
    %1322 = vmatpush.msra.mxu0 %v439
    %1323 = vmatmul.f32.gmra.mxu0 %v1305
    %v1324 = vpop.f32.mrf.mxu0
    %v1325 = vadd.f32 0.0, %v1324
    %1326 = vdwg.mxu0
    %1328 = vrot.lane.b32.xlu0 %v1300, 32
    %v1329 = vpop.permute.xlu0 %1328
    %v1330 = vsel %vm48, %v1329, 0
    %1332 = vmatpush.msra.mxu0 0.0
    %1333 = vmatpush.msra.mxu0 0.0
    %1334 = vmatpush.msra.mxu0 0.0
    %1335 = vmatpush.msra.mxu0 0.0
    %1336 = vmatpush.msra.mxu0 0.0
    %1337 = vmatpush.msra.mxu0 0.0
    %1338 = vmatpush.msra.mxu0 0.0
    %1339 = vmatpush.msra.mxu0 0.0
    %1340 = vmatpush.msra.mxu0 0.0
    %1341 = vmatpush.msra.mxu0 0.0
    %1342 = vmatpush.msra.mxu0 0.0
    %1343 = vmatpush.msra.mxu0 0.0
    %1344 = vmatpush.msra.mxu0 %v438
    %1345 = vmatpush.msra.mxu0 %v437
    %1346 = vmatpush.msra.mxu0 %v436
    %1347 = vmatpush.msra.mxu0 %v435
    %1348 = vmatmul.f32.gmra.mxu0 %v1330
    %v1349 = vpop.f32.mrf.mxu0
    %v1350 = vadd.f32 %v1325, %v1349
    %1351 = vdwg.mxu0
    %v1352 = vadd.f32 %v1350, %v565
    %v1353 = vtanh.pop %v1352
    %v1354 = vxor.u32 %v1352, 2147483648
    %v1355 = vmul.f32 %v1354, 1.442695
    %v1356 = vpow.pop %v1355
    %v1357 = vadd.f32 %v1356, 1.0
    %v1358 = vrcp.pop %v1357
    %v1359 = vmul.f32 %v1357, %v1358
    %v1360 = vsub.f32 1.0, %v1359
    %v1361 = vmul.f32 %v1358, %v1360
    %v1362 = vadd.f32 %v1358, %v1361
    %vm1363 = vweird.f32 %v1357
    %vm1364 = vweird.f32 %v1358
    %vm1365 = vmor %vm1363, %vm1364
    %v1366 = vsel %vm1365, %v1358, %v1362
    %v1367 = vand.u32 2147483647, %v1357
    %vm1368 = vcmp.eq.f32.partialorder %v1367, 8.507059e+37
    %v1369 = vand.u32 %v1357, 2147483648
    %v1370 = vor.u32 1.1754944e-38, %v1369
    %v1371 = vsel %vm1368, %v1370, %v1366
    %v1372 = vmul.f32 1.0, %v1371
    %v1373 = vsel %vm449, %v1353, %v1372
    %v1374 = vmul.f32 %v1373, %v1235
    %1376 = vrot.lane.b32.xlu0 %v1373, 64
    %v1377 = vpop.permute.xlu0 %1376
    %v1379 = vmul.f32 %v1373, %v1377
    %1381 = vrot.lane.b32.xlu0 %v1379, 32
    %v1382 = vpop.permute.xlu0 %1381
    %v1384 = vadd.f32 %v1374, %v1382
    %v1385 = vtanh.pop %v1384
    %1387 = vrot.lane.b32.xlu0 %v1385, 64
    %v1388 = vpop.permute.xlu0 %1387
    %v1390 = vmul.f32 %v1373, %v1388
    %v1391 = vsel %vm1299, %v1390, %v1234
    %v1392 = vsel %vm1299, %v1384, %v1235
    %vm1393 = vcmp.gt.s32.totalorder %v444, 6
    %1394 = vmatpush.msra.mxu0 0.0
    %1395 = vmatpush.msra.mxu0 0.0
    %1396 = vmatpush.msra.mxu0 0.0
    %1397 = vmatpush.msra.mxu0 0.0
    %1398 = vmatpush.msra.mxu0 0.0
    %1399 = vmatpush.msra.mxu0 0.0
    %1400 = vmatpush.msra.mxu0 0.0
    %1401 = vmatpush.msra.mxu0 0.0
    %1402 = vmatpush.msra.mxu0 0.0
    %1403 = vmatpush.msra.mxu0 0.0
    %1404 = vmatpush.msra.mxu0 0.0
    %1405 = vmatpush.msra.mxu0 0.0
    %1406 = vmatpush.msra.mxu0 %v434
    %1407 = vmatpush.msra.mxu0 %v433
    %1408 = vmatpush.msra.mxu0 %v432
    %1409 = vmatpush.msra.mxu0 %v431
    %1410 = vmatmul.f32.gmra.mxu0 %v1330
    %v1411 = vpop.f32.mrf.mxu0
    %v1412 = vadd.f32 %v426, %v1411
    %1413 = vdwg.mxu0
    %v1414 = vtanh.pop %v1412
    %v1415 = vxor.u32 %v1412, 2147483648
    %v1416 = vmul.f32 %v1415, 1.442695
    %v1417 = vpow.pop %v1416
    %v1418 = vadd.f32 %v1417, 1.0
    %v1419 = vrcp.pop %v1418
    %v1420 = vmul.f32 %v1418, %v1419
    %v1421 = vsub.f32 1.0, %v1420
    %v1422 = vmul.f32 %v1419, %v1421
    %v1423 = vadd.f32 %v1419, %v1422
    %vm1424 = vweird.f32 %v1418
    %vm1425 = vweird.f32 %v1419
    %vm1426 = vmor %vm1424, %vm1425
    %v1427 = vsel %vm1426, %v1419, %v1423
    %v1428 = vand.u32 2147483647, %v1418
    %vm1429 = vcmp.eq.f32.partialorder %v1428, 8.507059e+37
    %v1430 = vand.u32 %v1418, 2147483648
    %v1431 = vor.u32 1.1754944e-38, %v1430
    %v1432 = vsel %vm1429, %v1431, %v1427
    %v1433 = vmul.f32 1.0, %v1432
    %v1434 = vsel %vm449, %v1414, %v1433
    %v1435 = vmul.f32 %v1434, %v1301
    %1437 = vrot.lane.b32.xlu0 %v1434, 64
    %v1438 = vpop.permute.xlu0 %1437
    %v1440 = vmul.f32 %v1434, %v1438
    %1442 = vrot.lane.b32.xlu0 %v1440, 32
    %v1443 = vpop.permute.xlu0 %1442
    %v1445 = vadd.f32 %v1435, %v1443
    %v1446 = vtanh.pop %v1445
    %1448 = vrot.lane.b32.xlu0 %v1446, 64
    %v1449 = vpop.permute.xlu0 %1448
    %v1451 = vmul.f32 %v1434, %v1449
    %v1452 = vsel %vm1393, 1, 0
    %1453 = vset.pattern.permute.xlu0 0
    %1454 = vperm.xlu0 %1453, %v1452
    %v1455 = vpop.permute.xlu0 %1454
    %vm1456 = vcmp.eq.s32.totalorder %v1455, 1
    %v1457 = vsel %vm1456, %v1451, %v1300
    %v1458 = vsel %vm1456, %v1445, %v1301
    %1460 = vrot.lane.b32.xlu0 %v1391, 32
    %v1461 = vpop.permute.xlu0 %1460
    %v1462 = vsel %vm48, %v1461, 0
    %1464 = vmatpush.msra.mxu0 0.0
    %1465 = vmatpush.msra.mxu0 0.0
    %1466 = vmatpush.msra.mxu0 0.0
    %1467 = vmatpush.msra.mxu0 0.0
    %1468 = vmatpush.msra.mxu0 0.0
    %1469 = vmatpush.msra.mxu0 0.0
    %1470 = vmatpush.msra.mxu0 0.0
    %1471 = vmatpush.msra.mxu0 0.0
    %1472 = vmatpush.msra.mxu0 0.0
    %1473 = vmatpush.msra.mxu0 0.0
    %1474 = vmatpush.msra.mxu0 0.0
    %1475 = vmatpush.msra.mxu0 0.0
    %1476 = vmatpush.msra.mxu0 %v442
    %1477 = vmatpush.msra.mxu0 %v441
    %1478 = vmatpush.msra.mxu0 %v440
    %1479 = vmatpush.msra.mxu0 %v439
    %1480 = vmatmul.f32.gmra.mxu0 %v1462
    %v1481 = vpop.f32.mrf.mxu0
    %v1482 = vadd.f32 0.0, %v1481
    %1483 = vdwg.mxu0
    %1485 = vrot.lane.b32.xlu0 %v1457, 32
    %v1486 = vpop.permute.xlu0 %1485
    %v1487 = vsel %vm48, %v1486, 0
    %1489 = vmatpush.msra.mxu0 0.0
    %1490 = vmatpush.msra.mxu0 0.0
    %1491 = vmatpush.msra.mxu0 0.0
    %1492 = vmatpush.msra.mxu0 0.0
    %1493 = vmatpush.msra.mxu0 0.0
    %1494 = vmatpush.msra.mxu0 0.0
    %1495 = vmatpush.msra.mxu0 0.0
    %1496 = vmatpush.msra.mxu0 0.0
    %1497 = vmatpush.msra.mxu0 0.0
    %1498 = vmatpush.msra.mxu0 0.0
    %1499 = vmatpush.msra.mxu0 0.0
    %1500 = vmatpush.msra.mxu0 0.0
    %1501 = vmatpush.msra.mxu0 %v438
    %1502 = vmatpush.msra.mxu0 %v437
    %1503 = vmatpush.msra.mxu0 %v436
    %1504 = vmatpush.msra.mxu0 %v435
    %1505 = vmatmul.f32.gmra.mxu0 %v1487
    %v1506 = vpop.f32.mrf.mxu0
    %v1507 = vadd.f32 %v1482, %v1506
    %1508 = vdwg.mxu0
    %v1509 = vadd.f32 %v1507, %v565
    %v1510 = vtanh.pop %v1509
    %v1511 = vxor.u32 %v1509, 2147483648
    %v1512 = vmul.f32 %v1511, 1.442695
    %v1513 = vpow.pop %v1512
    %v1514 = vadd.f32 %v1513, 1.0
    %v1515 = vrcp.pop %v1514
    %v1516 = vmul.f32 %v1514, %v1515
    %v1517 = vsub.f32 1.0, %v1516
    %v1518 = vmul.f32 %v1515, %v1517
    %v1519 = vadd.f32 %v1515, %v1518
    %vm1520 = vweird.f32 %v1514
    %vm1521 = vweird.f32 %v1515
    %vm1522 = vmor %vm1520, %vm1521
    %v1523 = vsel %vm1522, %v1515, %v1519
    %v1524 = vand.u32 2147483647, %v1514
    %vm1525 = vcmp.eq.f32.partialorder %v1524, 8.507059e+37
    %v1526 = vand.u32 %v1514, 2147483648
    %v1527 = vor.u32 1.1754944e-38, %v1526
    %v1528 = vsel %vm1525, %v1527, %v1523
    %v1529 = vmul.f32 1.0, %v1528
    %v1530 = vsel %vm449, %v1510, %v1529
    %v1531 = vmul.f32 %v1530, %v1392
    %1533 = vrot.lane.b32.xlu0 %v1530, 64
    %v1534 = vpop.permute.xlu0 %1533
    %v1536 = vmul.f32 %v1530, %v1534
    %1538 = vrot.lane.b32.xlu0 %v1536, 32
    %v1539 = vpop.permute.xlu0 %1538
    %v1541 = vadd.f32 %v1531, %v1539
    %v1542 = vtanh.pop %v1541
    %1544 = vrot.lane.b32.xlu0 %v1542, 64
    %v1545 = vpop.permute.xlu0 %1544
    %v1547 = vmul.f32 %v1530, %v1545
    %v1548 = vsel %vm1456, %v1547, %v1391
    %v1549 = vsel %vm1456, %v1541, %v1392
    %vm1550 = vcmp.gt.s32.totalorder %v444, 7
    %1551 = vmatpush.msra.mxu0 0.0
    %1552 = vmatpush.msra.mxu0 0.0
    %1553 = vmatpush.msra.mxu0 0.0
    %1554 = vmatpush.msra.mxu0 0.0
    %1555 = vmatpush.msra.mxu0 0.0
    %1556 = vmatpush.msra.mxu0 0.0
    %1557 = vmatpush.msra.mxu0 0.0
    %1558 = vmatpush.msra.mxu0 0.0
    %1559 = vmatpush.msra.mxu0 0.0
    %1560 = vmatpush.msra.mxu0 0.0
    %1561 = vmatpush.msra.mxu0 0.0
    %1562 = vmatpush.msra.mxu0 0.0
    %1563 = vmatpush.msra.mxu0 %v434
    %1564 = vmatpush.msra.mxu0 %v433
    %1565 = vmatpush.msra.mxu0 %v432
    %1566 = vmatpush.msra.mxu0 %v431
    %1567 = vmatmul.f32.gmra.mxu0 %v1487
    %v1568 = vpop.f32.mrf.mxu0
    %v1569 = vadd.f32 %v429, %v1568
    %1570 = vdwg.mxu0
    %v1571 = vtanh.pop %v1569
    %v1572 = vxor.u32 %v1569, 2147483648
    %v1573 = vmul.f32 %v1572, 1.442695
    %v1574 = vpow.pop %v1573
    %v1575 = vadd.f32 %v1574, 1.0
    %v1576 = vrcp.pop %v1575
    %v1577 = vmul.f32 %v1575, %v1576
    %v1578 = vsub.f32 1.0, %v1577
    %v1579 = vmul.f32 %v1576, %v1578
    %v1580 = vadd.f32 %v1576, %v1579
    %vm1581 = vweird.f32 %v1575
    %vm1582 = vweird.f32 %v1576
    %vm1583 = vmor %vm1581, %vm1582
    %v1584 = vsel %vm1583, %v1576, %v1580
    %v1585 = vand.u32 2147483647, %v1575
    %vm1586 = vcmp.eq.f32.partialorder %v1585, 8.507059e+37
    %v1587 = vand.u32 %v1575, 2147483648
    %v1588 = vor.u32 1.1754944e-38, %v1587
    %v1589 = vsel %vm1586, %v1588, %v1584
    %v1590 = vmul.f32 1.0, %v1589
    %v1591 = vsel %vm449, %v1571, %v1590
    %v1592 = vmul.f32 %v1591, %v1458
    %1594 = vrot.lane.b32.xlu0 %v1591, 64
    %v1595 = vpop.permute.xlu0 %1594
    %v1597 = vmul.f32 %v1591, %v1595
    %1599 = vrot.lane.b32.xlu0 %v1597, 32
    %v1600 = vpop.permute.xlu0 %1599
    %v1602 = vadd.f32 %v1592, %v1600
    %v1603 = vtanh.pop %v1602
    %1605 = vrot.lane.b32.xlu0 %v1603, 64
    %v1606 = vpop.permute.xlu0 %1605
    %v1608 = vmul.f32 %v1591, %v1606
    %v1609 = vsel %vm1550, 1, 0
    %1610 = vset.pattern.permute.xlu0 0
    %1611 = vperm.xlu0 %1610, %v1609
    %v1612 = vpop.permute.xlu0 %1611
    %vm1613 = vcmp.eq.s32.totalorder %v1612, 1
    %v1614 = vsel %vm1613, %v1608, %v1457
    %1616 = vrot.lane.b32.xlu0 %v1548, 32
    %v1617 = vpop.permute.xlu0 %1616
    %v1618 = vsel %vm48, %v1617, 0
    %1620 = vmatpush.msra.mxu0 0.0
    %1621 = vmatpush.msra.mxu0 0.0
    %1622 = vmatpush.msra.mxu0 0.0
    %1623 = vmatpush.msra.mxu0 0.0
    %1624 = vmatpush.msra.mxu0 0.0
    %1625 = vmatpush.msra.mxu0 0.0
    %1626 = vmatpush.msra.mxu0 0.0
    %1627 = vmatpush.msra.mxu0 0.0
    %1628 = vmatpush.msra.mxu0 0.0
    %1629 = vmatpush.msra.mxu0 0.0
    %1630 = vmatpush.msra.mxu0 0.0
    %1631 = vmatpush.msra.mxu0 0.0
    %1632 = vmatpush.msra.mxu0 %v442
    %1633 = vmatpush.msra.mxu0 %v441
    %1634 = vmatpush.msra.mxu0 %v440
    %1635 = vmatpush.msra.mxu0 %v439
    %1636 = vmatmul.f32.gmra.mxu0 %v1618
    %v1637 = vpop.f32.mrf.mxu0
    %v1638 = vadd.f32 0.0, %v1637
    %1639 = vdwg.mxu0
    %1641 = vrot.lane.b32.xlu0 %v1614, 32
    %v1642 = vpop.permute.xlu0 %1641
    %v1643 = vsel %vm48, %v1642, 0
    %1645 = vmatpush.msra.mxu0 0.0
    %1646 = vmatpush.msra.mxu0 0.0
    %1647 = vmatpush.msra.mxu0 0.0
    %1648 = vmatpush.msra.mxu0 0.0
    %1649 = vmatpush.msra.mxu0 0.0
    %1650 = vmatpush.msra.mxu0 0.0
    %1651 = vmatpush.msra.mxu0 0.0
    %1652 = vmatpush.msra.mxu0 0.0
    %1653 = vmatpush.msra.mxu0 0.0
    %1654 = vmatpush.msra.mxu0 0.0
    %1655 = vmatpush.msra.mxu0 0.0
    %1656 = vmatpush.msra.mxu0 0.0
    %1657 = vmatpush.msra.mxu0 %v438
    %1658 = vmatpush.msra.mxu0 %v437
    %1659 = vmatpush.msra.mxu0 %v436
    %1660 = vmatpush.msra.mxu0 %v435
    %1661 = vmatmul.f32.gmra.mxu0 %v1643
    %v1662 = vpop.f32.mrf.mxu0
    %v1663 = vadd.f32 %v1638, %v1662
    %1664 = vdwg.mxu0
    %v1665 = vadd.f32 %v1663, %v565
    %v1666 = vtanh.pop %v1665
    %v1667 = vxor.u32 %v1665, 2147483648
    %v1668 = vmul.f32 %v1667, 1.442695
    %v1669 = vpow.pop %v1668
    %v1670 = vadd.f32 %v1669, 1.0
    %v1671 = vrcp.pop %v1670
    %v1672 = vmul.f32 %v1670, %v1671
    %v1673 = vsub.f32 1.0, %v1672
    %v1674 = vmul.f32 %v1671, %v1673
    %v1675 = vadd.f32 %v1671, %v1674
    %vm1676 = vweird.f32 %v1670
    %vm1677 = vweird.f32 %v1671
    %vm1678 = vmor %vm1676, %vm1677
    %v1679 = vsel %vm1678, %v1671, %v1675
    %v1680 = vand.u32 2147483647, %v1670
    %vm1681 = vcmp.eq.f32.partialorder %v1680, 8.507059e+37
    %v1682 = vand.u32 %v1670, 2147483648
    %v1683 = vor.u32 1.1754944e-38, %v1682
    %v1684 = vsel %vm1681, %v1683, %v1679
    %v1685 = vmul.f32 1.0, %v1684
    %v1686 = vsel %vm449, %v1666, %v1685
    %v1687 = vmul.f32 %v1686, %v1549
    %1689 = vrot.lane.b32.xlu0 %v1686, 64
    %v1690 = vpop.permute.xlu0 %1689
    %v1692 = vmul.f32 %v1686, %v1690
    %1694 = vrot.lane.b32.xlu0 %v1692, 32
    %v1695 = vpop.permute.xlu0 %1694
    %v1697 = vadd.f32 %v1687, %v1695
    %v1698 = vtanh.pop %v1697
    %1700 = vrot.lane.b32.xlu0 %v1698, 64
    %v1701 = vpop.permute.xlu0 %1700
    %v1703 = vmul.f32 %v1686, %v1701
    %v1704 = vsel %vm1613, %v1703, %v1548
    %v1705 = vld [vmem:[%s11] sm:$0xff]
    %v1706 = vld [vmem:[%s11 + $0x8] sm:$0xff]
    %v1707 = vld [vmem:[%s11 + $0x10] sm:$0xff]
    %v1708 = vld [vmem:[%s11 + $0x18] sm:$0xff]
    %v1709 = vld [vmem:[%s12] sm:$0x1]
    %v1711 = vperm.slane %v1709, 0
    %1714 = vrot.lane.b32.xlu0 %v1704, 32
    %v1715 = vpop.permute.xlu0 %1714
    %v1716 = vsel %vm48, %v1715, 0
    %1718 = vmatpush.msra.mxu0 0.0
    %1719 = vmatpush.msra.mxu0 0.0
    %1720 = vmatpush.msra.mxu0 0.0
    %1721 = vmatpush.msra.mxu0 0.0
    %1722 = vmatpush.msra.mxu0 0.0
    %1723 = vmatpush.msra.mxu0 0.0
    %1724 = vmatpush.msra.mxu0 0.0
    %1725 = vmatpush.msra.mxu0 0.0
    %1726 = vmatpush.msra.mxu0 0.0
    %1727 = vmatpush.msra.mxu0 0.0
    %1728 = vmatpush.msra.mxu0 0.0
    %1729 = vmatpush.msra.mxu0 0.0
    %1730 = vmatpush.msra.mxu0 %v1708
    %1731 = vmatpush.msra.mxu0 %v1707
    %1732 = vmatpush.msra.mxu0 %v1706
    %1733 = vmatpush.msra.mxu0 %v1705
    %1734 = vmatmul.f32.gmra.mxu0 %v1716
    %v1735 = vpop.f32.mrf.mxu0
    %v1736 = vadd.f32 %v1711, %v1735
    %1737 = vdwg.mxu0
    %1738 = vst [vmem:[#allocation3] sm:$0xff] %v1736
    // Predicated region
    $region58: #{icassp1_cnn_forward.1} parent=1 // pred_check
      _
    $region59: #{icassp1_cnn_forward.1} parent=1 // pred_check_branch
      %1740 = sbr.rel (0) target = $region61
    $region60: #{icassp1_cnn_forward.1} parent=1 // pred_region
      %1742 = vsyncadd [#allocation4], 0
      %s1744 = sshll.u32 [#allocation3], 4
      %s1745 = int_to_ptr.vmem [resolvable:$true] %s1744
      %s1746 = sshll.u32 %s14, 4
      %s1747 = int_to_ptr.hbm [resolvable:$true] %s1746
      %1749 = dma.vmem_to_hbm [thread:$0]  %s1745, 128, %s1747, [#allocation4]
    $region61: #{icassp1_cnn_forward.1} parent=1 // pred_fallthru
      _
    // Predicated region
    $region62: #{icassp1_cnn_forward.1} parent=1 // pred_check
      _
    $region63: #{icassp1_cnn_forward.1} parent=1 // pred_check_branch
      %1751 = sbr.rel (0) target = $region65
    $region64: #{icassp1_cnn_forward.1} parent=1 // pred_region
      %1753 = dma.done [#allocation4], 128
    $region65: #{icassp1_cnn_forward.1} parent=1 // pred_fallthru
      _
    %1754 = vsyncpa [#allocation4], 1

</llo_original>
